<compile_context>
chip_gen: v6e
topology: v6e:2x2x1
jax: 0.10.0
libtpu: 0.0.40
codegen_flags: <defaults>
</compile_context>

<pallas_src>
import functools
import math

import numpy as np

import jax
import jax.numpy as jnp
from jax import lax
from jax.experimental import pallas as pl
from jax.experimental.pallas import tpu as pltpu

_NEG_BIG = -1e30  # finite stand-in for -inf keeps the online LSE NaN-free


def _softmax_loss_kernel(emb_q_ref, emb_k_ref, cls_row_ref, cls_col_ref,
                         out_ref, m_sc, l_sc, *, b_real, tq, tk):
    i = pl.program_id(0)      # anchor-row tile
    phase = pl.program_id(1)  # 0: negative-LSE pass, 1: positive-pair pass
    k = pl.program_id(2)      # key-column tile (reduction axis, last)

    @pl.when((phase == 0) & (k == 0))
    def _init_row_stats():
        m_sc[...] = jnp.full_like(m_sc, _NEG_BIG)
        l_sc[...] = jnp.zeros_like(l_sc)

    @pl.when((phase == 1) & (k == 0))
    def _init_out():
        out_ref[...] = jnp.zeros_like(out_ref)

    # Logits tile on the MXU: bf16 x bf16 -> f32, both operands contracted on their
    # last (H) dim so no transpose/relayout is needed. The key operand was pre-scaled
    # by 1/temperature in the wrapper.
    d = lax.dot_general(
        emb_q_ref[...], emb_k_ref[...],
        dimension_numbers=(((1,), (1,)), ((), ())),
        preferred_element_type=jnp.float32)                       # (tq, tk) f32

    same = cls_row_ref[...] == cls_col_ref[...]                   # (tq, tk)
    col_ids = k * tk + lax.broadcasted_iota(jnp.int32, (tq, tk), 1)
    col_valid = col_ids < b_real                                  # mask batch padding

    @pl.when(phase == 0)
    def _neg_pass():
        neg = jnp.logical_and(jnp.logical_not(same), col_valid)
        d_neg = jnp.where(neg, d, _NEG_BIG)
        m_old = m_sc[...]
        m_new = jnp.maximum(m_old, jnp.max(d_neg, axis=1, keepdims=True))
        l_sc[...] = (jnp.exp(m_old - m_new) * l_sc[...]
                     + jnp.sum(jnp.where(neg, jnp.exp(d_neg - m_new), 0.0),
                               axis=1, keepdims=True))
        m_sc[...] = m_new

    @pl.when(phase == 1)
    def _pos_pass():
        row_ids = i * tq + lax.broadcasted_iota(jnp.int32, (tq, tk), 0)
        row_valid = row_ids < b_real
        pos = same & (row_ids != col_ids) & col_valid & row_valid
        # LSE over this row's negatives from the phase-0 stats.
        lse_neg = m_sc[...] + jnp.log(jnp.maximum(l_sc[...], 1e-37))    # (tq, 1)
        # loss(a, p) = softplus(lse_neg_a - d[a, p]) in its overflow-safe form.
        x = lse_neg - d
        pair_loss = jnp.maximum(x, 0.0) + jnp.log(1.0 + jnp.exp(-jnp.abs(x)))
        contrib = jnp.sum(jnp.where(pos, pair_loss, 0.0),
                          axis=0, keepdims=True)                        # (1, tk)
        out_ref[...] += contrib[None]                                   # (1, 1, tk)


def _round_up(x, m):
    return (x + m - 1) // m * m


def softmax_loss(embeddings, classes, temperature=0.05, *,
                 block_q=128, block_k=128):
    """embeddings: (B, H) float, classes: (B,) int -> scalar f32 loss."""
    B, H = embeddings.shape
    assert block_q % 8 == 0 and block_k % 128 == 0

    tq, tk = block_q, block_k
    b_pad = _round_up(B, math.lcm(tq, tk))
    h_pad = _round_up(H, 128)

    inv_t = jnp.float32(1.0 / float(temperature))
    emb_f32 = embeddings.astype(jnp.float32)

    def pad2(x):
        return jnp.pad(x, ((0, b_pad - x.shape[0]), (0, h_pad - x.shape[1])))

    # Anchors unscaled, keys pre-scaled by 1/temperature; bf16 into the MXU.
    e_q = pad2(emb_f32).astype(jnp.bfloat16)
    e_k = pad2(emb_f32 * inv_t).astype(jnp.bfloat16)

    cls_i32 = classes.astype(jnp.int32)
    cls_pad = jnp.pad(cls_i32, (0, b_pad - B), constant_values=-1)
    cls_row = cls_pad.reshape(b_pad, 1)
    cls_col = cls_pad.reshape(1, b_pad)

    r_tiles = b_pad // tq
    c_tiles = b_pad // tk

    kernel = functools.partial(_softmax_loss_kernel, b_real=B, tq=tq, tk=tk)

    partial = pl.pallas_call(
        kernel,
        out_shape=jax.ShapeDtypeStruct((r_tiles, 1, tk), jnp.float32),
        grid_spec=pltpu.PrefetchScalarGridSpec(
            num_scalar_prefetch=0,
            grid=(r_tiles, 2, c_tiles),
            in_specs=[
                pl.BlockSpec((tq, h_pad), lambda i, p, k: (i, 0)),  # anchor rows
                pl.BlockSpec((tk, h_pad), lambda i, p, k: (k, 0)),  # key columns
                pl.BlockSpec((tq, 1), lambda i, p, k: (i, 0)),      # classes (rows)
                pl.BlockSpec((1, tk), lambda i, p, k: (0, k)),      # classes (cols)
            ],
            out_specs=pl.BlockSpec((1, 1, tk), lambda i, p, k: (i, 0, 0)),
            scratch_shapes=[
                pltpu.VMEM((tq, 1), jnp.float32),  # running max over negatives
                pltpu.VMEM((tq, 1), jnp.float32),  # running sum(exp) over negatives
            ],
        ),
        compiler_params=pltpu.CompilerParams(
            dimension_semantics=("parallel", "arbitrary", "arbitrary")),
    )(e_q, e_k, cls_row, cls_col)

    # Number of positive (anchor, pos) pairs — computed host-side, not in-kernel.
    same = cls_i32[:, None] == cls_i32[None, :]
    n_pos = jnp.sum(same.astype(jnp.float32)) - jnp.float32(B)
    total = jnp.sum(partial)
    return total / jnp.maximum(n_pos, 1.0)  # guard: no positive pairs -> 0, not NaN


def _reference_loss(e_q, e_k, classes):
    """Direct transcription of the PyTorch gather-based forward.

    Takes the same (bf16-rounded, temperature-folded) operands the kernel sees,
    so the comparison isolates kernel logic from the intentional bf16 cast."""
    d = e_q.astype(np.float64) @ e_k.astype(np.float64).T
    cls = np.asarray(classes)
    pos = cls[:, None] == cls[None, :]
    np.fill_diagonal(pos, False)
    ix_a, ix_pos = np.nonzero(pos)
    neg = cls[ix_a][:, None] != cls[None, :]
    _, ix_neg = np.nonzero(neg)
    ix_neg = ix_neg.reshape(ix_a.shape[0], -1)
    ix_all = np.concatenate([ix_pos[:, None], ix_neg], axis=1)
    logits = d[ix_a[:, None], ix_all]
    m = logits.max(axis=1, keepdims=True)
    log_sm0 = logits[:, 0] - (m[:, 0] + np.log(np.exp(logits - m).sum(axis=1)))
    return float(-log_sm0.mean())


if __name__ == "__main__":
    temperature = 0.05
    n_classes, per_class, H = 25, 8, 40
    B = n_classes * per_class  # 200 -> padded to 256: a real 2x2 tile grid + padding path

    key = jax.random.PRNGKey(0)
    emb = jax.random.normal(key, (B, H), dtype=jnp.float32)
    emb = emb / jnp.linalg.norm(emb, axis=1, keepdims=True)  # l2-normalized for T=0.05
    classes = jnp.repeat(jnp.arange(n_classes, dtype=jnp.int32), per_class)

    loss = softmax_loss(emb, classes, temperature)
    loss = jax.block_until_ready(loss)

    # Reference fed the identical bf16-quantized / temperature-folded operands.
    e_q_ref = np.asarray(emb.astype(jnp.bfloat16).astype(jnp.float32))
    e_k_ref = np.asarray((emb * jnp.float32(1.0 / temperature))
                         .astype(jnp.bfloat16).astype(jnp.float32))
    ref = _reference_loss(e_q_ref, e_k_ref, np.asarray(classes))
    assert abs(float(loss) - ref) < 2e-3, (float(loss), ref)

    print("KERNEL_OK")
</pallas_src>

<mosaic_0001>
module attributes {stable_mosaic.version = 11 : i64} {
  func.func @_softmax_loss_kernel(%arg0: i32, %arg1: i32, %arg2: i32, %arg3: memref<128x128xbf16, #tpu.memory_space<vmem>>, %arg4: memref<128x128xbf16, #tpu.memory_space<vmem>>, %arg5: memref<128x1xi32, #tpu.memory_space<vmem>>, %arg6: memref<1x128xi32, #tpu.memory_space<vmem>>, %arg7: memref<1x1x128xf32, #tpu.memory_space<vmem>>, %arg8: memref<128x1xf32, #tpu.memory_space<vmem>>, %arg9: memref<128x1xf32, #tpu.memory_space<vmem>>) attributes {dimension_semantics = [#tpu.dimension_semantics<parallel>, #tpu.dimension_semantics<arbitrary>, #tpu.dimension_semantics<arbitrary>], iteration_bounds = array<i64: 2, 2, 2>, scalar_prefetch = 0 : i64, scratch_operands = 2 : i64, tpu.core_type = #tpu.core_type<tc>, window_params = [{transform_indices = @transform_0, window_bounds = array<i64: 128, 128>}, {transform_indices = @transform_1, window_bounds = array<i64: 128, 128>}, {transform_indices = @transform_2, window_bounds = array<i64: 128, 1>}, {transform_indices = @transform_3, window_bounds = array<i64: 1, 128>}, {transform_indices = @transform_4, window_bounds = array<i64: 1, 1, 128>}]} {
    %c0_i32 = arith.constant 0 : i32
    %0 = arith.cmpi eq, %arg1, %c0_i32 : i32
    %c0_i32_0 = arith.constant 0 : i32
    %1 = arith.cmpi eq, %arg2, %c0_i32_0 : i32
    %2 = arith.andi %0, %1 : i1
    %3 = arith.extui %2 : i1 to i32
    %c0_i32_1 = arith.constant 0 : i32
    %4 = arith.cmpi ne, %3, %c0_i32_1 : i32
    scf.if %4 {
      %cst_15 = arith.constant -1.000000e+30 : f32
      %30 = vector.broadcast %cst_15 : f32 to vector<128x1xf32>
      %c0_16 = arith.constant 0 : index
      %c0_17 = arith.constant 0 : index
      %31 = vector.load %arg8[%c0_16, %c0_17] : memref<128x1xf32, #tpu.memory_space<vmem>>, vector<128x1xf32>
      tpu.vector_store %arg8[%c0_16, %c0_17], %30 {strides = array<i32>} : memref<128x1xf32, #tpu.memory_space<vmem>>, vector<128x1xf32>,
      %cst_18 = arith.constant 0.000000e+00 : f32
      %32 = vector.broadcast %cst_18 : f32 to vector<128x1xf32>
      %c0_19 = arith.constant 0 : index
      %c0_20 = arith.constant 0 : index
      %33 = vector.load %arg9[%c0_19, %c0_20] : memref<128x1xf32, #tpu.memory_space<vmem>>, vector<128x1xf32>
      tpu.vector_store %arg9[%c0_19, %c0_20], %32 {strides = array<i32>} : memref<128x1xf32, #tpu.memory_space<vmem>>, vector<128x1xf32>,
    } else {
    }
    %c1_i32 = arith.constant 1 : i32
    %5 = arith.cmpi eq, %arg1, %c1_i32 : i32
    %c0_i32_2 = arith.constant 0 : i32
    %6 = arith.cmpi eq, %arg2, %c0_i32_2 : i32
    %7 = arith.andi %5, %6 : i1
    %8 = arith.extui %7 : i1 to i32
    %c0_i32_3 = arith.constant 0 : i32
    %9 = arith.cmpi ne, %8, %c0_i32_3 : i32
    scf.if %9 {
      %cst_15 = arith.constant 0.000000e+00 : f32
      %30 = vector.broadcast %cst_15 : f32 to vector<1x1x128xf32>
      %c0_16 = arith.constant 0 : index
      %c0_17 = arith.constant 0 : index
      %c0_18 = arith.constant 0 : index
      %31 = vector.load %arg7[%c0_16, %c0_17, %c0_18] : memref<1x1x128xf32, #tpu.memory_space<vmem>>, vector<1x1x128xf32>
      tpu.vector_store %arg7[%c0_16, %c0_17, %c0_18], %30 {strides = array<i32>} : memref<1x1x128xf32, #tpu.memory_space<vmem>>, vector<1x1x128xf32>,
    } else {
    }
    %c0 = arith.constant 0 : index
    %c0_4 = arith.constant 0 : index
    %10 = vector.load %arg3[%c0, %c0_4] : memref<128x128xbf16, #tpu.memory_space<vmem>>, vector<128x128xbf16>
    %c0_5 = arith.constant 0 : index
    %c0_6 = arith.constant 0 : index
    %11 = vector.load %arg4[%c0_5, %c0_6] : memref<128x128xbf16, #tpu.memory_space<vmem>>, vector<128x128xbf16>
    %cst = arith.constant dense<0.000000e+00> : vector<128x128xf32>
    %12 = tpu.matmul %10, %11, %cst {dimension_numbers = #tpu.dot_dimension_numbers<[1], [1], [0], [0], [0, 0, 1, 0], [], []>} : vector<128x128xbf16>, vector<128x128xbf16>, vector<128x128xf32> -> vector<128x128xf32>
    %c0_7 = arith.constant 0 : index
    %c0_8 = arith.constant 0 : index
    %13 = vector.load %arg5[%c0_7, %c0_8] : memref<128x1xi32, #tpu.memory_space<vmem>>, vector<128x1xi32>
    %c0_9 = arith.constant 0 : index
    %c0_10 = arith.constant 0 : index
    %14 = vector.load %arg6[%c0_9, %c0_10] : memref<1x128xi32, #tpu.memory_space<vmem>>, vector<1x128xi32>
    %15 = vector.broadcast %13 : vector<128x1xi32> to vector<128x128xi32>
    %16 = vector.broadcast %14 : vector<1x128xi32> to vector<128x128xi32>
    %17 = arith.cmpi eq, %15, %16 : vector<128x128xi32>
    %c128_i32 = arith.constant 128 : i32
    %18 = arith.muli %arg2, %c128_i32 : i32
    %19 = tpu.iota {dimensions = array<i32: 1>} : vector<128x128xi32>
    %20 = vector.broadcast %18 : i32 to vector<128x128xi32>
    %21 = arith.addi %20, %19 : vector<128x128xi32>
    %c200_i32 = arith.constant 200 : i32
    %22 = vector.broadcast %c200_i32 : i32 to vector<128x128xi32>
    %23 = arith.cmpi slt, %21, %22 : vector<128x128xi32>
    %c0_i32_11 = arith.constant 0 : i32
    %24 = arith.cmpi eq, %arg1, %c0_i32_11 : i32
    %25 = arith.extui %24 : i1 to i32
    %c0_i32_12 = arith.constant 0 : i32
    %26 = arith.cmpi ne, %25, %c0_i32_12 : i32
    scf.if %26 {
      %cst_15 = arith.constant dense<true> : vector<128x128xi1>
      %30 = arith.xori %17, %cst_15 : vector<128x128xi1>
      %31 = arith.andi %30, %23 : vector<128x128xi1>
      %cst_16 = arith.constant -1.000000e+30 : f32
      %32 = vector.broadcast %cst_16 : f32 to vector<128x128xf32>
      %33 = arith.select %31, %12, %32 : vector<128x128xi1>, vector<128x128xf32>
      %c0_17 = arith.constant 0 : index
      %c0_18 = arith.constant 0 : index
      %34 = vector.load %arg8[%c0_17, %c0_18] : memref<128x1xf32, #tpu.memory_space<vmem>>, vector<128x1xf32>
      %cst_19 = arith.constant dense<0xFF800000> : vector<128xf32>
      %35 = vector.multi_reduction <maximumf>, %33, %cst_19 [1] : vector<128x128xf32> to vector<128xf32>
      %36 = vector.shape_cast %35 : vector<128xf32> to vector<128x1xf32>
      %37 = arith.maximumf %34, %36 : vector<128x1xf32>
      %38 = arith.subf %34, %37 : vector<128x1xf32>
      %39 = math.exp %38 : vector<128x1xf32>
      %c0_20 = arith.constant 0 : index
      %c0_21 = arith.constant 0 : index
      %40 = vector.load %arg9[%c0_20, %c0_21] : memref<128x1xf32, #tpu.memory_space<vmem>>, vector<128x1xf32>
      %41 = arith.mulf %39, %40 : vector<128x1xf32>
      %42 = vector.broadcast %37 : vector<128x1xf32> to vector<128x128xf32>
      %43 = arith.subf %33, %42 : vector<128x128xf32>
      %44 = math.exp %43 : vector<128x128xf32>
      %cst_22 = arith.constant 0.000000e+00 : f32
      %45 = vector.broadcast %cst_22 : f32 to vector<128x128xf32>
      %46 = arith.select %31, %44, %45 : vector<128x128xi1>, vector<128x128xf32>
      %cst_23 = arith.constant dense<0.000000e+00> : vector<128xf32>
      %47 = vector.multi_reduction <add>, %46, %cst_23 [1] : vector<128x128xf32> to vector<128xf32>
      %48 = vector.shape_cast %47 : vector<128xf32> to vector<128x1xf32>
      %49 = arith.addf %41, %48 : vector<128x1xf32>
      %c0_24 = arith.constant 0 : index
      %c0_25 = arith.constant 0 : index
      %50 = vector.load %arg9[%c0_24, %c0_25] : memref<128x1xf32, #tpu.memory_space<vmem>>, vector<128x1xf32>
      tpu.vector_store %arg9[%c0_24, %c0_25], %49 {strides = array<i32>} : memref<128x1xf32, #tpu.memory_space<vmem>>, vector<128x1xf32>,
      %c0_26 = arith.constant 0 : index
      %c0_27 = arith.constant 0 : index
      %51 = vector.load %arg8[%c0_26, %c0_27] : memref<128x1xf32, #tpu.memory_space<vmem>>, vector<128x1xf32>
      tpu.vector_store %arg8[%c0_26, %c0_27], %37 {strides = array<i32>} : memref<128x1xf32, #tpu.memory_space<vmem>>, vector<128x1xf32>,
    } else {
    }
    %c1_i32_13 = arith.constant 1 : i32
    %27 = arith.cmpi eq, %arg1, %c1_i32_13 : i32
    %28 = arith.extui %27 : i1 to i32
    %c0_i32_14 = arith.constant 0 : i32
    %29 = arith.cmpi ne, %28, %c0_i32_14 : i32
    scf.if %29 {
      %c128_i32_15 = arith.constant 128 : i32
      %30 = arith.muli %arg0, %c128_i32_15 : i32
      %31 = tpu.iota {dimensions = array<i32: 0>} : vector<128x128xi32>
      %32 = vector.broadcast %30 : i32 to vector<128x128xi32>
      %33 = arith.addi %32, %31 : vector<128x128xi32>
      %c200_i32_16 = arith.constant 200 : i32
      %34 = vector.broadcast %c200_i32_16 : i32 to vector<128x128xi32>
      %35 = arith.cmpi slt, %33, %34 : vector<128x128xi32>
      %36 = arith.cmpi ne, %33, %21 : vector<128x128xi32>
      %37 = arith.andi %17, %36 : vector<128x128xi1>
      %38 = arith.andi %37, %23 : vector<128x128xi1>
      %39 = arith.andi %38, %35 : vector<128x128xi1>
      %c0_17 = arith.constant 0 : index
      %c0_18 = arith.constant 0 : index
      %40 = vector.load %arg8[%c0_17, %c0_18] : memref<128x1xf32, #tpu.memory_space<vmem>>, vector<128x1xf32>
      %c0_19 = arith.constant 0 : index
      %c0_20 = arith.constant 0 : index
      %41 = vector.load %arg9[%c0_19, %c0_20] : memref<128x1xf32, #tpu.memory_space<vmem>>, vector<128x1xf32>
      %cst_21 = arith.constant 9.99999991E-38 : f32
      %42 = vector.broadcast %cst_21 : f32 to vector<128x1xf32>
      %43 = arith.maximumf %41, %42 : vector<128x1xf32>
      %44 = math.log %43 : vector<128x1xf32>
      %45 = arith.addf %40, %44 : vector<128x1xf32>
      %46 = vector.broadcast %45 : vector<128x1xf32> to vector<128x128xf32>
      %47 = arith.subf %46, %12 : vector<128x128xf32>
      %cst_22 = arith.constant 0.000000e+00 : f32
      %48 = vector.broadcast %cst_22 : f32 to vector<128x128xf32>
      %49 = arith.maximumf %47, %48 : vector<128x128xf32>
      %50 = math.absf %47 : vector<128x128xf32>
      %cst_23 = arith.constant 0.000000e+00 : f32
      %51 = vector.broadcast %cst_23 : f32 to vector<128x128xf32>
      %52 = arith.subf %51, %50 : vector<128x128xf32>
      %53 = math.exp %52 : vector<128x128xf32>
      %cst_24 = arith.constant 1.000000e+00 : f32
      %54 = vector.broadcast %cst_24 : f32 to vector<128x128xf32>
      %55 = arith.addf %54, %53 : vector<128x128xf32>
      %56 = math.log %55 : vector<128x128xf32>
      %57 = arith.addf %49, %56 : vector<128x128xf32>
      %cst_25 = arith.constant 0.000000e+00 : f32
      %58 = vector.broadcast %cst_25 : f32 to vector<128x128xf32>
      %59 = arith.select %39, %57, %58 : vector<128x128xi1>, vector<128x128xf32>
      %cst_26 = arith.constant dense<0.000000e+00> : vector<128xf32>
      %60 = vector.multi_reduction <add>, %59, %cst_26 [0] : vector<128x128xf32> to vector<128xf32>
      %61 = vector.shape_cast %60 : vector<128xf32> to vector<1x128xf32>
      %c0_27 = arith.constant 0 : index
      %c0_28 = arith.constant 0 : index
      %c0_29 = arith.constant 0 : index
      %62 = vector.load %arg7[%c0_27, %c0_28, %c0_29] : memref<1x1x128xf32, #tpu.memory_space<vmem>>, vector<1x1x128xf32>
      %63 = vector.shape_cast %61 : vector<1x128xf32> to vector<1x1x128xf32>
      %64 = arith.addf %62, %63 : vector<1x1x128xf32>
      %c0_30 = arith.constant 0 : index
      %c0_31 = arith.constant 0 : index
      %c0_32 = arith.constant 0 : index
      %65 = vector.load %arg7[%c0_30, %c0_31, %c0_32] : memref<1x1x128xf32, #tpu.memory_space<vmem>>, vector<1x1x128xf32>
      tpu.vector_store %arg7[%c0_30, %c0_31, %c0_32], %64 {strides = array<i32>} : memref<1x1x128xf32, #tpu.memory_space<vmem>>, vector<1x1x128xf32>,
    } else {
    }
    return
  }
  func.func @transform_0(%arg0: i32, %arg1: i32, %arg2: i32) -> (i32, i32) {
    %c0_i32 = arith.constant 0 : i32
    %c0_i32_0 = arith.constant 0 : i32
    return %arg0, %c0_i32 : i32, i32
  }
  func.func @transform_1(%arg0: i32, %arg1: i32, %arg2: i32) -> (i32, i32) {
    %c0_i32 = arith.constant 0 : i32
    %c0_i32_0 = arith.constant 0 : i32
    return %arg2, %c0_i32 : i32, i32
  }
  func.func @transform_2(%arg0: i32, %arg1: i32, %arg2: i32) -> (i32, i32) {
    %c0_i32 = arith.constant 0 : i32
    %c0_i32_0 = arith.constant 0 : i32
    return %arg0, %c0_i32 : i32, i32
  }
  func.func @transform_3(%arg0: i32, %arg1: i32, %arg2: i32) -> (i32, i32) {
    %c0_i32 = arith.constant 0 : i32
    %c0_i32_0 = arith.constant 0 : i32
    return %c0_i32, %arg2 : i32, i32
  }
  func.func @transform_4(%arg0: i32, %arg1: i32, %arg2: i32) -> (i32, i32, i32) {
    %c0_i32 = arith.constant 0 : i32
    %c0_i32_0 = arith.constant 0 : i32
    %c0_i32_1 = arith.constant 0 : i32
    return %arg0, %c0_i32, %c0_i32_0 : i32, i32, i32
  }
}

</mosaic_0001>

<llo_original>
// kernel: tpu_custom_call.1
$region0: #{tpu_custom_call.1}
  #allocation0 [shape = 'u32[]', space=smem, size = 0x4, offset = 0x4, fixed_abs, tag = 'smem constant byte address 0x4 - core index']
  #allocation1 [shape = 'u32[144,128]{1,0:T(1,128)}', space=vmem, size = 0x12000, scoped, tag = 'internal scratch']
  #allocation2 [shape = 'f32[128,1]{1,0:T(8,128)}', space=vmem, size = 0x10000, scoped, tag = 'scratch operand']
  #allocation3 [shape = 'f32[128,1]{1,0:T(8,128)}', space=vmem, size = 0x10000, scoped, tag = 'scratch operand']
  %s0 = inlined_call_operand.vmem [shape: bf16[256,128], index: 0, kind: input, shape index: {}]
  %s1 = inlined_call_operand.vmem [shape: bf16[256,128], index: 1, kind: input, shape index: {}]
  %s2 = inlined_call_operand.vmem [shape: s32[256,1], index: 2, kind: input, shape index: {}]
  %s3 = inlined_call_operand.vmem [shape: s32[1,256], index: 3, kind: input, shape index: {}]
  %s4 = inlined_call_operand.hbm [shape: f32[2,1,128], index: 4, kind: output, shape index: {}]
  %s5 = sld [smem:[#allocation0]]
  $region65: #{tpu_custom_call.1} parent=0
    _
  %s7 = ssub.s32 1, %s5
  %s8 = scalar_select 0, %s7, %s5
  $region1: #{tpu_custom_call.1} parent=0
    #allocation4 [shape = 'u8[1024]{0}', space=vmem, size = 0x400, scoped, tag = 'output window, operand 0']
    #allocation5 [shape = 's32[2]{0}', space=sflag, size = 0x8, scoped, tag = 'scoped memory for tpu_custom_call.1']
    %9 = vsyncpa [#allocation5], 0
    %s10 = scalar_lea.sflag [#allocation5], 1
    %11 = vsyncpa %s10, 0
    loop: start=0, step=1, limit=10
    $region2: #{tpu_custom_call.1} parent=1 // loop_pre_header
      _
    $region3: #{tpu_custom_call.1} parent=1 // loop_header
      %s13 = sphi 0, %s17
      %p14 = scmp.ge.s32.totalorder %s13, 10
      %s20 = sphi 0, %s39
      %s21 = sphi 0, %s35
      %s22 = sphi 0, %s31
      %s23 = sphi 0, %s20
      %s24 = sphi 0, %s21
      %s25 = sphi 0, %s22
      %s26 = sphi 0, %s23
      %s27 = sphi 0, %s24
      %s28 = sphi 0, %s25
      %s42 = sphi 0, %s44
      %s45 = sphi 0, %s42
      %s46 = sphi 0, %s45
      %s62 = sphi 0, %s46
      %s68 = sphi 0, %s70
      %s71 = sphi 0, %s68
      %s72 = sphi 0, %s71
      %s88 = sphi 0, %s72
      %s94 = sphi 0, %s96
      %s97 = sphi 0, %s94
      %s98 = sphi 0, %s97
      %s114 = sphi 0, %s98
      %s120 = sphi 0, %s122
      %s123 = sphi 0, %s120
      %s124 = sphi 0, %s123
      %s140 = sphi 0, %s124
      %s146 = sphi 0, %s148
      %s149 = sphi 0, %s146
      %s150 = sphi 0, %s149
      %s166 = sphi 0, %s150
    $region4: #{tpu_custom_call.1} parent=1 // loop_header_branch
      %16 = sbr.rel (%p14) target = $region8
    $region5: #{tpu_custom_call.1} parent=1 // loop_body
      %s18 = ssub.s32 %s13, 1
      %s19 = ssub.s32 %s13, 2
      %s29 = sadd.s32 1, %s22
      %p30 = scmp.ge.s32.totalorder %s29, 2
      %s31 = scalar_select %p30, 0, %s29
      %s32 = sadd.s32 1, %s21
      %s33 = scalar_select %p30, %s32, %s21
      %p34 = scmp.ge.s32.totalorder %s33, 2
      %s35 = scalar_select %p34, 0, %s33
      %s36 = sadd.s32 1, %s20
      %s37 = scalar_select %p34, %s36, %s20
      %p38 = scmp.ge.s32.totalorder %s37, 2
      %s39 = scalar_select %p38, 0, %s37
      %s40 = ssub.s32 %s20, %s39
      %p41 = scmp.eq.s32.totalorder %s40, 0
      %s43 = sadd.s32 %s42, 1
      %s44 = scalar_select %p41, %s42, %s43
      %p47 = pneg %p41
      %p48 = scmp.eq.s32.totalorder %s13, 7
      %p49 = por %p47, %p48
      %p50 = scmp.ne.s32.totalorder %s42, %s45
      %p51 = scmp.eq.s32.totalorder %s13, 0
      %p52 = por %p50, %p51
      %p53 = scmp.ne.s32.totalorder %s42, %s45
      %p54 = scmp.eq.s32.totalorder %s18, 7
      %p55 = por %p53, %p54
      %p56 = scmp.ne.s32.totalorder %s45, %s46
      %p57 = scmp.eq.s32.totalorder %s18, 0
      %p58 = por %p56, %p57
      %p59 = scmp.ne.s32.totalorder %s45, %s46
      %p60 = scmp.eq.s32.totalorder %s19, 7
      %p61 = por %p59, %p60
      %p63 = scmp.ne.s32.totalorder %s46, %s62
      %p64 = scmp.eq.s32.totalorder %s19, 0
      %p65 = por %p63, %p64
      %s66 = ssub.s32 %s22, %s31
      %p67 = scmp.eq.s32.totalorder %s66, 0
      %s69 = sadd.s32 %s68, 1
      %s70 = scalar_select %p67, %s68, %s69
      %p73 = pneg %p67
      %p74 = scmp.eq.s32.totalorder %s13, 7
      %p75 = por %p73, %p74
      %p76 = scmp.ne.s32.totalorder %s68, %s71
      %p77 = scmp.eq.s32.totalorder %s13, 0
      %p78 = por %p76, %p77
      %p79 = scmp.ne.s32.totalorder %s68, %s71
      %p80 = scmp.eq.s32.totalorder %s18, 7
      %p81 = por %p79, %p80
      %p82 = scmp.ne.s32.totalorder %s71, %s72
      %p83 = scmp.eq.s32.totalorder %s18, 0
      %p84 = por %p82, %p83
      %p85 = scmp.ne.s32.totalorder %s71, %s72
      %p86 = scmp.eq.s32.totalorder %s19, 7
      %p87 = por %p85, %p86
      %p89 = scmp.ne.s32.totalorder %s72, %s88
      %p90 = scmp.eq.s32.totalorder %s19, 0
      %p91 = por %p89, %p90
      %s92 = ssub.s32 %s20, %s39
      %p93 = scmp.eq.s32.totalorder %s92, 0
      %s95 = sadd.s32 %s94, 1
      %s96 = scalar_select %p93, %s94, %s95
      %p99 = pneg %p93
      %p100 = scmp.eq.s32.totalorder %s13, 7
      %p101 = por %p99, %p100
      %p102 = scmp.ne.s32.totalorder %s94, %s97
      %p103 = scmp.eq.s32.totalorder %s13, 0
      %p104 = por %p102, %p103
      %p105 = scmp.ne.s32.totalorder %s94, %s97
      %p106 = scmp.eq.s32.totalorder %s18, 7
      %p107 = por %p105, %p106
      %p108 = scmp.ne.s32.totalorder %s97, %s98
      %p109 = scmp.eq.s32.totalorder %s18, 0
      %p110 = por %p108, %p109
      %p111 = scmp.ne.s32.totalorder %s97, %s98
      %p112 = scmp.eq.s32.totalorder %s19, 7
      %p113 = por %p111, %p112
      %p115 = scmp.ne.s32.totalorder %s98, %s114
      %p116 = scmp.eq.s32.totalorder %s19, 0
      %p117 = por %p115, %p116
      %s118 = ssub.s32 %s22, %s31
      %p119 = scmp.eq.s32.totalorder %s118, 0
      %s121 = sadd.s32 %s120, 1
      %s122 = scalar_select %p119, %s120, %s121
      %p125 = pneg %p119
      %p126 = scmp.eq.s32.totalorder %s13, 7
      %p127 = por %p125, %p126
      %p128 = scmp.ne.s32.totalorder %s120, %s123
      %p129 = scmp.eq.s32.totalorder %s13, 0
      %p130 = por %p128, %p129
      %p131 = scmp.ne.s32.totalorder %s120, %s123
      %p132 = scmp.eq.s32.totalorder %s18, 7
      %p133 = por %p131, %p132
      %p134 = scmp.ne.s32.totalorder %s123, %s124
      %p135 = scmp.eq.s32.totalorder %s18, 0
      %p136 = por %p134, %p135
      %p137 = scmp.ne.s32.totalorder %s123, %s124
      %p138 = scmp.eq.s32.totalorder %s19, 7
      %p139 = por %p137, %p138
      %p141 = scmp.ne.s32.totalorder %s124, %s140
      %p142 = scmp.eq.s32.totalorder %s19, 0
      %p143 = por %p141, %p142
      %s144 = ssub.s32 %s20, %s39
      %p145 = scmp.eq.s32.totalorder %s144, 0
      %s147 = sadd.s32 %s146, 1
      %s148 = scalar_select %p145, %s146, %s147
      %p151 = pneg %p145
      %p152 = scmp.eq.s32.totalorder %s13, 7
      %p153 = por %p151, %p152
      %p154 = scmp.ne.s32.totalorder %s146, %s149
      %p155 = scmp.eq.s32.totalorder %s13, 0
      %p156 = por %p154, %p155
      %p157 = scmp.ne.s32.totalorder %s146, %s149
      %p158 = scmp.eq.s32.totalorder %s18, 7
      %p159 = por %p157, %p158
      %p160 = scmp.ne.s32.totalorder %s149, %s150
      %p161 = scmp.eq.s32.totalorder %s18, 0
      %p162 = por %p160, %p161
      %p163 = scmp.ne.s32.totalorder %s149, %s150
      %p164 = scmp.eq.s32.totalorder %s19, 7
      %p165 = por %p163, %p164
      %p167 = scmp.ne.s32.totalorder %s150, %s166
      %p168 = scmp.eq.s32.totalorder %s19, 0
      %p169 = por %p167, %p168
      %p170 = scmp.le.s32.totalorder 1, %s13
      %p171 = scmp.lt.s32.totalorder %s13, 9
      %p172 = pnand %p170, %p171
      %p173 = pneg %p172
      // Predicated region
      $region9: #{tpu_custom_call.1} parent=5 // pred_check
        _
      $region10: #{tpu_custom_call.1} parent=5 // pred_check_branch
        %175 = sbr.rel (%p172) target = $region12
      $region11: #{tpu_custom_call.1} parent=5 // pred_region
        %s176 = ssub.s32 %s13, 1
      $region12: #{tpu_custom_call.1} parent=5 // pred_fallthru
        _
      %p177 = scmp.lt.s32.totalorder %s13, 8
      // Predicated region
      $region13: #{tpu_custom_call.1} parent=5 // pred_check
        %p178 = pneg %p177
      $region14: #{tpu_custom_call.1} parent=5 // pred_check_branch
        %180 = sbr.rel (%p178) target = $region16
      $region15: #{tpu_custom_call.1} parent=5 // pred_region
        // Predicated region
        $region17: #{tpu_custom_call.1} parent=15 // pred_check
          %p181 = pneg %p52
        $region18: #{tpu_custom_call.1} parent=15 // pred_check_branch
          %183 = sbr.rel (%p181) target = $region20
        $region19: #{tpu_custom_call.1} parent=15 // pred_region
          %s184 = smul.u32 16, %s20
          %p185 = scmp.lt.s32.totalorder %s184, 31
          %s186 = scalar_select %p185, %s184, 31
          %s187 = smul.addr %s186, 4
          %s188 = scalar_lea.vmem %s0, %s187
          %s189 = smul.u32 16, %s20
        $region20: #{tpu_custom_call.1} parent=15 // pred_fallthru
          _
        // Predicated region
        $region21: #{tpu_custom_call.1} parent=15 // pred_check
          %p190 = pneg %p78
        $region22: #{tpu_custom_call.1} parent=15 // pred_check_branch
          %192 = sbr.rel (%p190) target = $region24
        $region23: #{tpu_custom_call.1} parent=15 // pred_region
          %s193 = smul.u32 16, %s22
          %p194 = scmp.lt.s32.totalorder %s193, 31
          %s195 = scalar_select %p194, %s193, 31
          %s196 = smul.addr %s195, 4
          %s197 = scalar_lea.vmem %s1, %s196
          %s198 = smul.u32 16, %s22
        $region24: #{tpu_custom_call.1} parent=15 // pred_fallthru
          _
        // Predicated region
        $region25: #{tpu_custom_call.1} parent=15 // pred_check
          %p199 = pneg %p104
        $region26: #{tpu_custom_call.1} parent=15 // pred_check_branch
          %201 = sbr.rel (%p199) target = $region28
        $region27: #{tpu_custom_call.1} parent=15 // pred_region
          %s202 = smul.u32 16, %s20
          %p203 = scmp.lt.s32.totalorder %s202, 31
          %s204 = scalar_select %p203, %s202, 31
          %s205 = smul.addr %s204, 8
          %s206 = scalar_lea.vmem %s2, %s205
          %s207 = smul.u32 16, %s20
        $region28: #{tpu_custom_call.1} parent=15 // pred_fallthru
          _
        // Predicated region
        $region29: #{tpu_custom_call.1} parent=15 // pred_check
          %p208 = pneg %p130
        $region30: #{tpu_custom_call.1} parent=15 // pred_check_branch
          %210 = sbr.rel (%p208) target = $region32
        $region31: #{tpu_custom_call.1} parent=15 // pred_region
          %p211 = scmp.lt.s32.totalorder %s22, 1
          %s212 = scalar_select %p211, %s22, 1
          %s213 = scalar_lea.vmem %s3, %s212
        $region32: #{tpu_custom_call.1} parent=15 // pred_fallthru
          _
      $region16: #{tpu_custom_call.1} parent=5 // pred_fallthru
        _
      %p214 = scmp.le.s32.totalorder 1, %s13
      %p215 = scmp.lt.s32.totalorder %s13, 9
      %p216 = pnand %p214, %p215
      %p217 = pneg %p216
      // Predicated region
      $region33: #{tpu_custom_call.1} parent=5 // pred_check
        _
      $region34: #{tpu_custom_call.1} parent=5 // pred_check_branch
        %219 = sbr.rel (%p216) target = $region36
      $region35: #{tpu_custom_call.1} parent=5 // pred_region
        %s220 = ssub.s32 %s13, 1
        %s221 = smul.u32 16, %s23
        %p222 = scmp.lt.s32.totalorder %s221, 31
        %s223 = scalar_select %p222, %s221, 31
        %s224 = smul.addr %s223, 4
        %s225 = scalar_lea.vmem %s0, %s224
        %p226 = pneg %p58
        %p227 = pneg %p55
        %s228 = smul.u32 16, %s25
        %p229 = scmp.lt.s32.totalorder %s228, 31
        %s230 = scalar_select %p229, %s228, 31
        %s231 = smul.addr %s230, 4
        %s232 = scalar_lea.vmem %s1, %s231
        %p233 = pneg %p84
        %p234 = pneg %p81
        %s235 = smul.u32 16, %s23
        %p236 = scmp.lt.s32.totalorder %s235, 31
        %s237 = scalar_select %p236, %s235, 31
        %s238 = smul.addr %s237, 8
        %s239 = scalar_lea.vmem %s2, %s238
        %p240 = pneg %p110
        %p241 = pneg %p107
        %p242 = scmp.lt.s32.totalorder %s25, 1
        %s243 = scalar_select %p242, %s25, 1
        %s244 = scalar_lea.vmem %s3, %s243
        %p245 = pneg %p136
        %p246 = pneg %p133
        %p247 = pneg %p162
        %p248 = pneg %p159
        %s249 = sand.u32 %s149, 1
        %s250 = scalar_lea.sflag [#allocation5], %s249
        %s251 = sand.u32 %s149, 1
        %s252 = scalar_lea.vmem [#allocation4], %s251
        %s253 = smul.u32 16, %s23
        %p254 = scmp.lt.s32.totalorder %s253, 31
        %s255 = scalar_select %p254, %s253, 31
        %s256 = smul.addr %s255, 4
        %s257 = scalar_lea.vmem %s0, %s256
        %s258 = smul.u32 16, %s23
        %s259 = smul.u32 16, %s25
        %p260 = scmp.lt.s32.totalorder %s259, 31
        %s261 = scalar_select %p260, %s259, 31
        %s262 = smul.addr %s261, 4
        %s263 = scalar_lea.vmem %s1, %s262
        %s264 = smul.u32 16, %s25
        %s265 = smul.u32 16, %s23
        %p266 = scmp.lt.s32.totalorder %s265, 31
        %s267 = scalar_select %p266, %s265, 31
        %s268 = smul.addr %s267, 8
        %s269 = scalar_lea.vmem %s2, %s268
        %s270 = smul.u32 16, %s23
        %p271 = scmp.lt.s32.totalorder %s25, 1
        %s272 = scalar_select %p271, %s25, 1
        %s273 = scalar_lea.vmem %s3, %s272
        %p275 = scmp.eq.s32.totalorder %s24, 0
        %p276 = scmp.eq.s32.totalorder %s25, 0
        %p277 = pnand %p275, %p276
        %p278 = pneg %p277
        // Predicated region
        $region37: #{tpu_custom_call.1} parent=35 // pred_check
          _
        $region38: #{tpu_custom_call.1} parent=35 // pred_check_branch
          %280 = sbr.rel (%p277) target = $region40
        $region39: #{tpu_custom_call.1} parent=35 // pred_region
          %vm281 = vcmask 7168
          %282 = vst.msk [vmem:[#allocation2] sm:$0xff] %vm281, -1e+30
          %283 = vst.msk [vmem:[#allocation2 + $0x8] sm:$0xff] %vm281, -1e+30
          %284 = vst.msk [vmem:[#allocation2 + $0x10] sm:$0xff] %vm281, -1e+30
          %285 = vst.msk [vmem:[#allocation2 + $0x18] sm:$0xff] %vm281, -1e+30
          %286 = vst.msk [vmem:[#allocation2 + $0x20] sm:$0xff] %vm281, -1e+30
          %287 = vst.msk [vmem:[#allocation2 + $0x28] sm:$0xff] %vm281, -1e+30
          %288 = vst.msk [vmem:[#allocation2 + $0x30] sm:$0xff] %vm281, -1e+30
          %289 = vst.msk [vmem:[#allocation2 + $0x38] sm:$0xff] %vm281, -1e+30
          %290 = vst.msk [vmem:[#allocation2 + $0x40] sm:$0xff] %vm281, -1e+30
          %291 = vst.msk [vmem:[#allocation2 + $0x48] sm:$0xff] %vm281, -1e+30
          %292 = vst.msk [vmem:[#allocation2 + $0x50] sm:$0xff] %vm281, -1e+30
          %293 = vst.msk [vmem:[#allocation2 + $0x58] sm:$0xff] %vm281, -1e+30
          %294 = vst.msk [vmem:[#allocation2 + $0x60] sm:$0xff] %vm281, -1e+30
          %295 = vst.msk [vmem:[#allocation2 + $0x68] sm:$0xff] %vm281, -1e+30
          %296 = vst.msk [vmem:[#allocation2 + $0x70] sm:$0xff] %vm281, -1e+30
          %297 = vst.msk [vmem:[#allocation2 + $0x78] sm:$0xff] %vm281, -1e+30
          %298 = vst.msk [vmem:[#allocation3] sm:$0xff] %vm281, 0.0
          %299 = vst.msk [vmem:[#allocation3 + $0x8] sm:$0xff] %vm281, 0.0
          %300 = vst.msk [vmem:[#allocation3 + $0x10] sm:$0xff] %vm281, 0.0
          %301 = vst.msk [vmem:[#allocation3 + $0x18] sm:$0xff] %vm281, 0.0
          %302 = vst.msk [vmem:[#allocation3 + $0x20] sm:$0xff] %vm281, 0.0
          %303 = vst.msk [vmem:[#allocation3 + $0x28] sm:$0xff] %vm281, 0.0
          %304 = vst.msk [vmem:[#allocation3 + $0x30] sm:$0xff] %vm281, 0.0
          %305 = vst.msk [vmem:[#allocation3 + $0x38] sm:$0xff] %vm281, 0.0
          %306 = vst.msk [vmem:[#allocation3 + $0x40] sm:$0xff] %vm281, 0.0
          %307 = vst.msk [vmem:[#allocation3 + $0x48] sm:$0xff] %vm281, 0.0
          %308 = vst.msk [vmem:[#allocation3 + $0x50] sm:$0xff] %vm281, 0.0
          %309 = vst.msk [vmem:[#allocation3 + $0x58] sm:$0xff] %vm281, 0.0
          %310 = vst.msk [vmem:[#allocation3 + $0x60] sm:$0xff] %vm281, 0.0
          %311 = vst.msk [vmem:[#allocation3 + $0x68] sm:$0xff] %vm281, 0.0
          %312 = vst.msk [vmem:[#allocation3 + $0x70] sm:$0xff] %vm281, 0.0
          %313 = vst.msk [vmem:[#allocation3 + $0x78] sm:$0xff] %vm281, 0.0
        $region40: #{tpu_custom_call.1} parent=35 // pred_fallthru
          _
        %p314 = scmp.eq.s32.totalorder %s24, 1
        %p315 = pnand %p314, %p276
        %p316 = pneg %p315
        // Predicated region
        $region41: #{tpu_custom_call.1} parent=35 // pred_check
          _
        $region42: #{tpu_custom_call.1} parent=35 // pred_check_branch
          %318 = sbr.rel (%p315) target = $region44
        $region43: #{tpu_custom_call.1} parent=35 // pred_region
          %319 = vst [vmem:[%s252] sm:$0x1] 0.0
        $region44: #{tpu_custom_call.1} parent=35 // pred_fallthru
          _
        %v320 = vld [vmem:[%s257] sm:$0xf]
        %v321 = vld [vmem:[%s257 + $0x4] sm:$0xf]
        %v322 = vld [vmem:[%s257 + $0x8] sm:$0xf]
        %v323 = vld [vmem:[%s257 + $0xc] sm:$0xf]
        %v324 = vld [vmem:[%s257 + $0x10] sm:$0xf]
        %v325 = vld [vmem:[%s257 + $0x14] sm:$0xf]
        %v326 = vld [vmem:[%s257 + $0x18] sm:$0xf]
        %v327 = vld [vmem:[%s257 + $0x1c] sm:$0xf]
        %v328 = vld [vmem:[%s257 + $0x20] sm:$0xf]
        %v329 = vld [vmem:[%s257 + $0x24] sm:$0xf]
        %v330 = vld [vmem:[%s257 + $0x28] sm:$0xf]
        %v331 = vld [vmem:[%s257 + $0x2c] sm:$0xf]
        %v332 = vld [vmem:[%s257 + $0x30] sm:$0xf]
        %v333 = vld [vmem:[%s257 + $0x34] sm:$0xf]
        %v334 = vld [vmem:[%s257 + $0x38] sm:$0xf]
        %v335 = vld [vmem:[%s257 + $0x3c] sm:$0xf]
        %v336 = vld [vmem:[%s263] sm:$0xf]
        %v337 = vld [vmem:[%s263 + $0x4] sm:$0xf]
        %v338 = vld [vmem:[%s263 + $0x8] sm:$0xf]
        %v339 = vld [vmem:[%s263 + $0xc] sm:$0xf]
        %v340 = vld [vmem:[%s263 + $0x10] sm:$0xf]
        %v341 = vld [vmem:[%s263 + $0x14] sm:$0xf]
        %v342 = vld [vmem:[%s263 + $0x18] sm:$0xf]
        %v343 = vld [vmem:[%s263 + $0x1c] sm:$0xf]
        %v344 = vld [vmem:[%s263 + $0x20] sm:$0xf]
        %v345 = vld [vmem:[%s263 + $0x24] sm:$0xf]
        %v346 = vld [vmem:[%s263 + $0x28] sm:$0xf]
        %v347 = vld [vmem:[%s263 + $0x2c] sm:$0xf]
        %v348 = vld [vmem:[%s263 + $0x30] sm:$0xf]
        %v349 = vld [vmem:[%s263 + $0x34] sm:$0xf]
        %v350 = vld [vmem:[%s263 + $0x38] sm:$0xf]
        %v351 = vld [vmem:[%s263 + $0x3c] sm:$0xf]
        %v368 = vunpack.c.l.b16 %v320
        %v369 = vunpack.c.l.b16 %v321
        %v370 = vunpack.c.l.b16 %v322
        %v371 = vunpack.c.l.b16 %v323
        %v372 = vunpack.c.l.b16 %v324
        %v373 = vunpack.c.l.b16 %v325
        %v374 = vunpack.c.l.b16 %v326
        %v375 = vunpack.c.l.b16 %v327
        %v376 = vunpack.c.l.b16 %v328
        %v377 = vunpack.c.l.b16 %v329
        %v378 = vunpack.c.l.b16 %v330
        %v379 = vunpack.c.l.b16 %v331
        %v380 = vunpack.c.l.b16 %v332
        %v381 = vunpack.c.l.b16 %v333
        %v382 = vunpack.c.l.b16 %v334
        %v383 = vunpack.c.l.b16 %v335
        %v384 = vpack.c.b16 %v369, %v368
        %v385 = vpack.c.b16 %v371, %v370
        %v386 = vpack.c.b16 %v373, %v372
        %v387 = vpack.c.b16 %v375, %v374
        %v388 = vpack.c.b16 %v377, %v376
        %v389 = vpack.c.b16 %v379, %v378
        %v390 = vpack.c.b16 %v381, %v380
        %v391 = vpack.c.b16 %v383, %v382
        %v416 = vunpack.c.l.b16 %v336
        %v417 = vunpack.c.l.b16 %v337
        %v418 = vunpack.c.l.b16 %v338
        %v419 = vunpack.c.l.b16 %v339
        %v420 = vunpack.c.l.b16 %v340
        %v421 = vunpack.c.l.b16 %v341
        %v422 = vunpack.c.l.b16 %v342
        %v423 = vunpack.c.l.b16 %v343
        %v424 = vunpack.c.l.b16 %v344
        %v425 = vunpack.c.l.b16 %v345
        %v426 = vunpack.c.l.b16 %v346
        %v427 = vunpack.c.l.b16 %v347
        %v428 = vunpack.c.l.b16 %v348
        %v429 = vunpack.c.l.b16 %v349
        %v430 = vunpack.c.l.b16 %v350
        %v431 = vunpack.c.l.b16 %v351
        %v432 = vpack.c.b16 %v417, %v416
        %v433 = vpack.c.b16 %v419, %v418
        %v434 = vpack.c.b16 %v421, %v420
        %v435 = vpack.c.b16 %v423, %v422
        %v436 = vpack.c.b16 %v425, %v424
        %v437 = vpack.c.b16 %v427, %v426
        %v438 = vpack.c.b16 %v429, %v428
        %v439 = vpack.c.b16 %v431, %v430
        %448 = vmatprep.subr.bf16.mxu0 0
        %449 = vmatpush1.bf16.xpose.msra.mxu0 %v439
        %450 = vmatprep.subr.bf16.mxu0 0
        %451 = vmatpush1.bf16.xpose.msra.mxu0 %v438
        %452 = vmatprep.subr.bf16.mxu0 0
        %453 = vmatpush1.bf16.xpose.msra.mxu0 %v437
        %454 = vmatprep.subr.bf16.mxu0 0
        %455 = vmatpush1.bf16.xpose.msra.mxu0 %v436
        %456 = vmatprep.subr.bf16.mxu0 0
        %457 = vmatpush1.bf16.xpose.msra.mxu0 %v435
        %458 = vmatprep.subr.bf16.mxu0 0
        %459 = vmatpush1.bf16.xpose.msra.mxu0 %v434
        %460 = vmatprep.subr.bf16.mxu0 0
        %461 = vmatpush1.bf16.xpose.msra.mxu0 %v433
        %462 = vmatprep.subr.bf16.mxu0 0
        %463 = vmatpush1.bf16.xpose.msra.mxu0 %v432
        %464 = vmatprep.subr.bf16.mxu0 0
        %465 = vmatpush2.bf16.xpose.msra.mxu0 0
        %466 = vmatprep.subr.bf16.mxu0 0
        %467 = vmatpush2.bf16.xpose.msra.mxu0 0
        %468 = vmatprep.subr.bf16.mxu0 0
        %469 = vmatpush2.bf16.xpose.msra.mxu0 0
        %470 = vmatprep.subr.bf16.mxu0 0
        %471 = vmatpush2.bf16.xpose.msra.mxu0 0
        %472 = vmatprep.subr.bf16.mxu0 0
        %473 = vmatpush2.bf16.xpose.msra.mxu0 0
        %474 = vmatprep.subr.bf16.mxu0 0
        %475 = vmatpush2.bf16.xpose.msra.mxu0 0
        %476 = vmatprep.subr.bf16.mxu0 0
        %477 = vmatpush2.bf16.xpose.msra.mxu0 0
        %478 = vmatprep.subr.bf16.mxu0 0
        %479 = vmatpush2.bf16.xpose.msra.mxu0 0
        %480 = vmatprep.mubr.bf16.mxu0 0
        %481 = vmatmul.mubr.bf16.gmra.mxu0 %v384
        %v482 = vpop.f32.mrf.mxu0
        %v483 = vadd.f32 0.0, %v482
        %v484 = vpop.f32.mrf.mxu0
        %v485 = vpop.f32.mrf.mxu0
        %v486 = vadd.f32 0.0, %v485
        %v487 = vpop.f32.mrf.mxu0
        %488 = vmatprep.mubr.bf16.mxu0 0
        %489 = vmatmul.mubr.bf16.gmra.mxu0 %v385
        %v490 = vpop.f32.mrf.mxu0
        %v491 = vadd.f32 0.0, %v490
        %v492 = vpop.f32.mrf.mxu0
        %v493 = vpop.f32.mrf.mxu0
        %v494 = vadd.f32 0.0, %v493
        %v495 = vpop.f32.mrf.mxu0
        %496 = vmatprep.mubr.bf16.mxu0 0
        %497 = vmatmul.mubr.bf16.gmra.mxu0 %v386
        %v498 = vpop.f32.mrf.mxu0
        %v499 = vadd.f32 0.0, %v498
        %v500 = vpop.f32.mrf.mxu0
        %v501 = vpop.f32.mrf.mxu0
        %v502 = vadd.f32 0.0, %v501
        %v503 = vpop.f32.mrf.mxu0
        %504 = vmatprep.mubr.bf16.mxu0 0
        %505 = vmatmul.mubr.bf16.gmra.mxu0 %v387
        %v506 = vpop.f32.mrf.mxu0
        %v507 = vadd.f32 0.0, %v506
        %v508 = vpop.f32.mrf.mxu0
        %v509 = vpop.f32.mrf.mxu0
        %v510 = vadd.f32 0.0, %v509
        %v511 = vpop.f32.mrf.mxu0
        %512 = vmatprep.mubr.bf16.mxu0 0
        %513 = vmatmul.mubr.bf16.gmra.mxu0 %v388
        %v514 = vpop.f32.mrf.mxu0
        %v515 = vadd.f32 0.0, %v514
        %v516 = vpop.f32.mrf.mxu0
        %v517 = vpop.f32.mrf.mxu0
        %v518 = vadd.f32 0.0, %v517
        %v519 = vpop.f32.mrf.mxu0
        %520 = vmatprep.mubr.bf16.mxu0 0
        %521 = vmatmul.mubr.bf16.gmra.mxu0 %v389
        %v522 = vpop.f32.mrf.mxu0
        %v523 = vadd.f32 0.0, %v522
        %v524 = vpop.f32.mrf.mxu0
        %v525 = vpop.f32.mrf.mxu0
        %v526 = vadd.f32 0.0, %v525
        %v527 = vpop.f32.mrf.mxu0
        %528 = vmatprep.mubr.bf16.mxu0 0
        %529 = vmatmul.mubr.bf16.gmra.mxu0 %v390
        %v530 = vpop.f32.mrf.mxu0
        %v531 = vadd.f32 0.0, %v530
        %v532 = vpop.f32.mrf.mxu0
        %v533 = vpop.f32.mrf.mxu0
        %v534 = vadd.f32 0.0, %v533
        %v535 = vpop.f32.mrf.mxu0
        %536 = vmatprep.mubr.bf16.mxu0 0
        %537 = vmatmul.mubr.bf16.gmra.mxu0 %v391
        %v538 = vpop.f32.mrf.mxu0
        %v539 = vadd.f32 0.0, %v538
        %v540 = vpop.f32.mrf.mxu0
        %v541 = vpop.f32.mrf.mxu0
        %v542 = vadd.f32 0.0, %v541
        %v543 = vpop.f32.mrf.mxu0
        %544 = vdwg.mxu0
        %v545 = vld [vmem:[%s269] sm:$0xff]
        %v546 = vld [vmem:[%s269 + $0x8] sm:$0xff]
        %v547 = vld [vmem:[%s269 + $0x10] sm:$0xff]
        %v548 = vld [vmem:[%s269 + $0x18] sm:$0xff]
        %v549 = vld [vmem:[%s269 + $0x20] sm:$0xff]
        %v550 = vld [vmem:[%s269 + $0x28] sm:$0xff]
        %v551 = vld [vmem:[%s269 + $0x30] sm:$0xff]
        %v552 = vld [vmem:[%s269 + $0x38] sm:$0xff]
        %v553 = vld [vmem:[%s269 + $0x40] sm:$0xff]
        %v554 = vld [vmem:[%s269 + $0x48] sm:$0xff]
        %v555 = vld [vmem:[%s269 + $0x50] sm:$0xff]
        %v556 = vld [vmem:[%s269 + $0x58] sm:$0xff]
        %v557 = vld [vmem:[%s269 + $0x60] sm:$0xff]
        %v558 = vld [vmem:[%s269 + $0x68] sm:$0xff]
        %v559 = vld [vmem:[%s269 + $0x70] sm:$0xff]
        %v560 = vld [vmem:[%s269 + $0x78] sm:$0xff]
        %v561 = vld [vmem:[%s273] sm:$0x1]
        %562 = vset.pattern.permute.xlu0 0
        %563 = vperm.xlu0 %562, %v545
        %v564 = vpop.permute.xlu0 %563
        %565 = vset.pattern.permute.xlu0 0
        %566 = vperm.xlu0 %565, %v546
        %v567 = vpop.permute.xlu0 %566
        %568 = vset.pattern.permute.xlu0 0
        %569 = vperm.xlu0 %568, %v547
        %v570 = vpop.permute.xlu0 %569
        %571 = vset.pattern.permute.xlu0 0
        %572 = vperm.xlu0 %571, %v548
        %v573 = vpop.permute.xlu0 %572
        %574 = vset.pattern.permute.xlu0 0
        %575 = vperm.xlu0 %574, %v549
        %v576 = vpop.permute.xlu0 %575
        %577 = vset.pattern.permute.xlu0 0
        %578 = vperm.xlu0 %577, %v550
        %v579 = vpop.permute.xlu0 %578
        %580 = vset.pattern.permute.xlu0 0
        %581 = vperm.xlu0 %580, %v551
        %v582 = vpop.permute.xlu0 %581
        %583 = vset.pattern.permute.xlu0 0
        %584 = vperm.xlu0 %583, %v552
        %v585 = vpop.permute.xlu0 %584
        %586 = vset.pattern.permute.xlu0 0
        %587 = vperm.xlu0 %586, %v553
        %v588 = vpop.permute.xlu0 %587
        %589 = vset.pattern.permute.xlu0 0
        %590 = vperm.xlu0 %589, %v554
        %v591 = vpop.permute.xlu0 %590
        %592 = vset.pattern.permute.xlu0 0
        %593 = vperm.xlu0 %592, %v555
        %v594 = vpop.permute.xlu0 %593
        %595 = vset.pattern.permute.xlu0 0
        %596 = vperm.xlu0 %595, %v556
        %v597 = vpop.permute.xlu0 %596
        %598 = vset.pattern.permute.xlu0 0
        %599 = vperm.xlu0 %598, %v557
        %v600 = vpop.permute.xlu0 %599
        %601 = vset.pattern.permute.xlu0 0
        %602 = vperm.xlu0 %601, %v558
        %v603 = vpop.permute.xlu0 %602
        %604 = vset.pattern.permute.xlu0 0
        %605 = vperm.xlu0 %604, %v559
        %v606 = vpop.permute.xlu0 %605
        %607 = vset.pattern.permute.xlu0 0
        %608 = vperm.xlu0 %607, %v560
        %v609 = vpop.permute.xlu0 %608
        %v610 = vlaneseq
        %v611 = vshrl.u32 %v610, 7
        %v612 = vsub.s32 0, %v611
        %v613 = vrot.slane %v561, %v612
        %vm614 = vcmp.eq.s32.totalorder %v564, %v613
        %vm615 = vcmp.eq.s32.totalorder %v567, %v613
        %vm616 = vcmp.eq.s32.totalorder %v570, %v613
        %vm617 = vcmp.eq.s32.totalorder %v573, %v613
        %vm618 = vcmp.eq.s32.totalorder %v576, %v613
        %vm619 = vcmp.eq.s32.totalorder %v579, %v613
        %vm620 = vcmp.eq.s32.totalorder %v582, %v613
        %vm621 = vcmp.eq.s32.totalorder %v585, %v613
        %vm622 = vcmp.eq.s32.totalorder %v588, %v613
        %vm623 = vcmp.eq.s32.totalorder %v591, %v613
        %vm624 = vcmp.eq.s32.totalorder %v594, %v613
        %vm625 = vcmp.eq.s32.totalorder %v597, %v613
        %vm626 = vcmp.eq.s32.totalorder %v600, %v613
        %vm627 = vcmp.eq.s32.totalorder %v603, %v613
        %vm628 = vcmp.eq.s32.totalorder %v606, %v613
        %vm629 = vcmp.eq.s32.totalorder %v609, %v613
        %s630 = smul.u32 %s25, 128
        %v631 = vlaneseq
        %v632 = vand.u32 %v631, 127
        %v633 = vstv %s630
        %v634 = vadd.s32 %v633, %v632
        %vm635 = vcmp.lt.s32.totalorder %v634, 200
        // Predicated region
        $region45: #{tpu_custom_call.1} parent=35 // pred_check
          %p636 = pneg %p275
        $region46: #{tpu_custom_call.1} parent=35 // pred_check_branch
          %638 = sbr.rel (%p636) target = $region48
        $region47: #{tpu_custom_call.1} parent=35 // pred_region
          %vm639 = vmxor %vm614, 1
          %vm640 = vmxor %vm615, 1
          %vm641 = vmxor %vm616, 1
          %vm642 = vmxor %vm617, 1
          %vm643 = vmxor %vm618, 1
          %vm644 = vmxor %vm619, 1
          %vm645 = vmxor %vm620, 1
          %vm646 = vmxor %vm621, 1
          %vm647 = vmxor %vm622, 1
          %vm648 = vmxor %vm623, 1
          %vm649 = vmxor %vm624, 1
          %vm650 = vmxor %vm625, 1
          %vm651 = vmxor %vm626, 1
          %vm652 = vmxor %vm627, 1
          %vm653 = vmxor %vm628, 1
          %vm654 = vmxor %vm629, 1
          %vm655 = vmand %vm639, %vm635
          %vm656 = vmand %vm640, %vm635
          %vm657 = vmand %vm641, %vm635
          %vm658 = vmand %vm642, %vm635
          %vm659 = vmand %vm643, %vm635
          %vm660 = vmand %vm644, %vm635
          %vm661 = vmand %vm645, %vm635
          %vm662 = vmand %vm646, %vm635
          %vm663 = vmand %vm647, %vm635
          %vm664 = vmand %vm648, %vm635
          %vm665 = vmand %vm649, %vm635
          %vm666 = vmand %vm650, %vm635
          %vm667 = vmand %vm651, %vm635
          %vm668 = vmand %vm652, %vm635
          %vm669 = vmand %vm653, %vm635
          %vm670 = vmand %vm654, %vm635
          %v671 = vsel %vm655, %v483, -1e+30
          %v672 = vsel %vm656, %v486, -1e+30
          %v673 = vsel %vm657, %v491, -1e+30
          %v674 = vsel %vm658, %v494, -1e+30
          %v675 = vsel %vm659, %v499, -1e+30
          %v676 = vsel %vm660, %v502, -1e+30
          %v677 = vsel %vm661, %v507, -1e+30
          %v678 = vsel %vm662, %v510, -1e+30
          %v679 = vsel %vm663, %v515, -1e+30
          %v680 = vsel %vm664, %v518, -1e+30
          %v681 = vsel %vm665, %v523, -1e+30
          %v682 = vsel %vm666, %v526, -1e+30
          %v683 = vsel %vm667, %v531, -1e+30
          %v684 = vsel %vm668, %v534, -1e+30
          %v685 = vsel %vm669, %v539, -1e+30
          %v686 = vsel %vm670, %v542, -1e+30
          %v687 = vld [vmem:[#allocation2] sm:$0xff]
          %v688 = vld [vmem:[#allocation2 + $0x8] sm:$0xff]
          %v689 = vld [vmem:[#allocation2 + $0x10] sm:$0xff]
          %v690 = vld [vmem:[#allocation2 + $0x18] sm:$0xff]
          %v691 = vld [vmem:[#allocation2 + $0x20] sm:$0xff]
          %v692 = vld [vmem:[#allocation2 + $0x28] sm:$0xff]
          %v693 = vld [vmem:[#allocation2 + $0x30] sm:$0xff]
          %v694 = vld [vmem:[#allocation2 + $0x38] sm:$0xff]
          %v695 = vld [vmem:[#allocation2 + $0x40] sm:$0xff]
          %v696 = vld [vmem:[#allocation2 + $0x48] sm:$0xff]
          %v697 = vld [vmem:[#allocation2 + $0x50] sm:$0xff]
          %v698 = vld [vmem:[#allocation2 + $0x58] sm:$0xff]
          %v699 = vld [vmem:[#allocation2 + $0x60] sm:$0xff]
          %v700 = vld [vmem:[#allocation2 + $0x68] sm:$0xff]
          %v701 = vld [vmem:[#allocation2 + $0x70] sm:$0xff]
          %v702 = vld [vmem:[#allocation2 + $0x78] sm:$0xff]
          %703 = vmax.xlane.f32.xlu0 %v671
          %v704 = vpop.xlane.xlu0 %703
          %705 = vmax.xlane.f32.xlu0 %v672
          %v706 = vpop.xlane.xlu0 %705
          %707 = vmax.xlane.f32.xlu0 %v673
          %v708 = vpop.xlane.xlu0 %707
          %709 = vmax.xlane.f32.xlu0 %v674
          %v710 = vpop.xlane.xlu0 %709
          %711 = vmax.xlane.f32.xlu0 %v675
          %v712 = vpop.xlane.xlu0 %711
          %713 = vmax.xlane.f32.xlu0 %v676
          %v714 = vpop.xlane.xlu0 %713
          %715 = vmax.xlane.f32.xlu0 %v677
          %v716 = vpop.xlane.xlu0 %715
          %717 = vmax.xlane.f32.xlu0 %v678
          %v718 = vpop.xlane.xlu0 %717
          %719 = vmax.xlane.f32.xlu0 %v679
          %v720 = vpop.xlane.xlu0 %719
          %721 = vmax.xlane.f32.xlu0 %v680
          %v722 = vpop.xlane.xlu0 %721
          %723 = vmax.xlane.f32.xlu0 %v681
          %v724 = vpop.xlane.xlu0 %723
          %725 = vmax.xlane.f32.xlu0 %v682
          %v726 = vpop.xlane.xlu0 %725
          %727 = vmax.xlane.f32.xlu0 %v683
          %v728 = vpop.xlane.xlu0 %727
          %729 = vmax.xlane.f32.xlu0 %v684
          %v730 = vpop.xlane.xlu0 %729
          %731 = vmax.xlane.f32.xlu0 %v685
          %v732 = vpop.xlane.xlu0 %731
          %733 = vmax.xlane.f32.xlu0 %v686
          %v734 = vpop.xlane.xlu0 %733
          %v735 = vmax.f32 %v687, %v704
          %v736 = vmax.f32 %v688, %v706
          %v737 = vmax.f32 %v689, %v708
          %v738 = vmax.f32 %v690, %v710
          %v739 = vmax.f32 %v691, %v712
          %v740 = vmax.f32 %v692, %v714
          %v741 = vmax.f32 %v693, %v716
          %v742 = vmax.f32 %v694, %v718
          %v743 = vmax.f32 %v695, %v720
          %v744 = vmax.f32 %v696, %v722
          %v745 = vmax.f32 %v697, %v724
          %v746 = vmax.f32 %v698, %v726
          %v747 = vmax.f32 %v699, %v728
          %v748 = vmax.f32 %v700, %v730
          %v749 = vmax.f32 %v701, %v732
          %v750 = vmax.f32 %v702, %v734
          %v751 = vsub.f32 %v687, %v735
          %v752 = vsub.f32 %v688, %v736
          %v753 = vsub.f32 %v689, %v737
          %v754 = vsub.f32 %v690, %v738
          %v755 = vsub.f32 %v691, %v739
          %v756 = vsub.f32 %v692, %v740
          %v757 = vsub.f32 %v693, %v741
          %v758 = vsub.f32 %v694, %v742
          %v759 = vsub.f32 %v695, %v743
          %v760 = vsub.f32 %v696, %v744
          %v761 = vsub.f32 %v697, %v745
          %v762 = vsub.f32 %v698, %v746
          %v763 = vsub.f32 %v699, %v747
          %v764 = vsub.f32 %v700, %v748
          %v765 = vsub.f32 %v701, %v749
          %v766 = vsub.f32 %v702, %v750
          %v767 = vmul.f32 %v751, 1.442695
          %v768 = vpow.pop %v767
          %v769 = vmul.f32 %v752, 1.442695
          %v770 = vpow.pop %v769
          %v771 = vmul.f32 %v753, 1.442695
          %v772 = vpow.pop %v771
          %v773 = vmul.f32 %v754, 1.442695
          %v774 = vpow.pop %v773
          %v775 = vmul.f32 %v755, 1.442695
          %v776 = vpow.pop %v775
          %v777 = vmul.f32 %v756, 1.442695
          %v778 = vpow.pop %v777
          %v779 = vmul.f32 %v757, 1.442695
          %v780 = vpow.pop %v779
          %v781 = vmul.f32 %v758, 1.442695
          %v782 = vpow.pop %v781
          %v783 = vmul.f32 %v759, 1.442695
          %v784 = vpow.pop %v783
          %v785 = vmul.f32 %v760, 1.442695
          %v786 = vpow.pop %v785
          %v787 = vmul.f32 %v761, 1.442695
          %v788 = vpow.pop %v787
          %v789 = vmul.f32 %v762, 1.442695
          %v790 = vpow.pop %v789
          %v791 = vmul.f32 %v763, 1.442695
          %v792 = vpow.pop %v791
          %v793 = vmul.f32 %v764, 1.442695
          %v794 = vpow.pop %v793
          %v795 = vmul.f32 %v765, 1.442695
          %v796 = vpow.pop %v795
          %v797 = vmul.f32 %v766, 1.442695
          %v798 = vpow.pop %v797
          %v799 = vld [vmem:[#allocation3] sm:$0xff]
          %v800 = vld [vmem:[#allocation3 + $0x8] sm:$0xff]
          %v801 = vld [vmem:[#allocation3 + $0x10] sm:$0xff]
          %v802 = vld [vmem:[#allocation3 + $0x18] sm:$0xff]
          %v803 = vld [vmem:[#allocation3 + $0x20] sm:$0xff]
          %v804 = vld [vmem:[#allocation3 + $0x28] sm:$0xff]
          %v805 = vld [vmem:[#allocation3 + $0x30] sm:$0xff]
          %v806 = vld [vmem:[#allocation3 + $0x38] sm:$0xff]
          %v807 = vld [vmem:[#allocation3 + $0x40] sm:$0xff]
          %v808 = vld [vmem:[#allocation3 + $0x48] sm:$0xff]
          %v809 = vld [vmem:[#allocation3 + $0x50] sm:$0xff]
          %v810 = vld [vmem:[#allocation3 + $0x58] sm:$0xff]
          %v811 = vld [vmem:[#allocation3 + $0x60] sm:$0xff]
          %v812 = vld [vmem:[#allocation3 + $0x68] sm:$0xff]
          %v813 = vld [vmem:[#allocation3 + $0x70] sm:$0xff]
          %v814 = vld [vmem:[#allocation3 + $0x78] sm:$0xff]
          %v815 = vmul.f32 %v768, %v799
          %v816 = vmul.f32 %v770, %v800
          %v817 = vmul.f32 %v772, %v801
          %v818 = vmul.f32 %v774, %v802
          %v819 = vmul.f32 %v776, %v803
          %v820 = vmul.f32 %v778, %v804
          %v821 = vmul.f32 %v780, %v805
          %v822 = vmul.f32 %v782, %v806
          %v823 = vmul.f32 %v784, %v807
          %v824 = vmul.f32 %v786, %v808
          %v825 = vmul.f32 %v788, %v809
          %v826 = vmul.f32 %v790, %v810
          %v827 = vmul.f32 %v792, %v811
          %v828 = vmul.f32 %v794, %v812
          %v829 = vmul.f32 %v796, %v813
          %v830 = vmul.f32 %v798, %v814
          %832 = vset.pattern.permute.xlu0 0
          %833 = vperm.xlu0 %832, %v735
          %v834 = vpop.permute.xlu0 %833
          %837 = vset.pattern.permute.xlu0 0
          %838 = vperm.xlu0 %837, %v736
          %v839 = vpop.permute.xlu0 %838
          %842 = vset.pattern.permute.xlu0 0
          %843 = vperm.xlu0 %842, %v737
          %v844 = vpop.permute.xlu0 %843
          %847 = vset.pattern.permute.xlu0 0
          %848 = vperm.xlu0 %847, %v738
          %v849 = vpop.permute.xlu0 %848
          %852 = vset.pattern.permute.xlu0 0
          %853 = vperm.xlu0 %852, %v739
          %v854 = vpop.permute.xlu0 %853
          %857 = vset.pattern.permute.xlu0 0
          %858 = vperm.xlu0 %857, %v740
          %v859 = vpop.permute.xlu0 %858
          %862 = vset.pattern.permute.xlu0 0
          %863 = vperm.xlu0 %862, %v741
          %v864 = vpop.permute.xlu0 %863
          %867 = vset.pattern.permute.xlu0 0
          %868 = vperm.xlu0 %867, %v742
          %v869 = vpop.permute.xlu0 %868
          %872 = vset.pattern.permute.xlu0 0
          %873 = vperm.xlu0 %872, %v743
          %v874 = vpop.permute.xlu0 %873
          %877 = vset.pattern.permute.xlu0 0
          %878 = vperm.xlu0 %877, %v744
          %v879 = vpop.permute.xlu0 %878
          %882 = vset.pattern.permute.xlu0 0
          %883 = vperm.xlu0 %882, %v745
          %v884 = vpop.permute.xlu0 %883
          %887 = vset.pattern.permute.xlu0 0
          %888 = vperm.xlu0 %887, %v746
          %v889 = vpop.permute.xlu0 %888
          %892 = vset.pattern.permute.xlu0 0
          %893 = vperm.xlu0 %892, %v747
          %v894 = vpop.permute.xlu0 %893
          %897 = vset.pattern.permute.xlu0 0
          %898 = vperm.xlu0 %897, %v748
          %v899 = vpop.permute.xlu0 %898
          %902 = vset.pattern.permute.xlu0 0
          %903 = vperm.xlu0 %902, %v749
          %v904 = vpop.permute.xlu0 %903
          %907 = vset.pattern.permute.xlu0 0
          %908 = vperm.xlu0 %907, %v750
          %v909 = vpop.permute.xlu0 %908
          %v911 = vsub.f32 %v671, %v834
          %v912 = vsub.f32 %v672, %v839
          %v913 = vsub.f32 %v673, %v844
          %v914 = vsub.f32 %v674, %v849
          %v915 = vsub.f32 %v675, %v854
          %v916 = vsub.f32 %v676, %v859
          %v917 = vsub.f32 %v677, %v864
          %v918 = vsub.f32 %v678, %v869
          %v919 = vsub.f32 %v679, %v874
          %v920 = vsub.f32 %v680, %v879
          %v921 = vsub.f32 %v681, %v884
          %v922 = vsub.f32 %v682, %v889
          %v923 = vsub.f32 %v683, %v894
          %v924 = vsub.f32 %v684, %v899
          %v925 = vsub.f32 %v685, %v904
          %v926 = vsub.f32 %v686, %v909
          %v927 = vmul.f32 %v911, 1.442695
          %v928 = vpow.pop %v927
          %v929 = vmul.f32 %v912, 1.442695
          %v930 = vpow.pop %v929
          %v931 = vmul.f32 %v913, 1.442695
          %v932 = vpow.pop %v931
          %v933 = vmul.f32 %v914, 1.442695
          %v934 = vpow.pop %v933
          %v935 = vmul.f32 %v915, 1.442695
          %v936 = vpow.pop %v935
          %v937 = vmul.f32 %v916, 1.442695
          %v938 = vpow.pop %v937
          %v939 = vmul.f32 %v917, 1.442695
          %v940 = vpow.pop %v939
          %v941 = vmul.f32 %v918, 1.442695
          %v942 = vpow.pop %v941
          %v943 = vmul.f32 %v919, 1.442695
          %v944 = vpow.pop %v943
          %v945 = vmul.f32 %v920, 1.442695
          %v946 = vpow.pop %v945
          %v947 = vmul.f32 %v921, 1.442695
          %v948 = vpow.pop %v947
          %v949 = vmul.f32 %v922, 1.442695
          %v950 = vpow.pop %v949
          %v951 = vmul.f32 %v923, 1.442695
          %v952 = vpow.pop %v951
          %v953 = vmul.f32 %v924, 1.442695
          %v954 = vpow.pop %v953
          %v955 = vmul.f32 %v925, 1.442695
          %v956 = vpow.pop %v955
          %v957 = vmul.f32 %v926, 1.442695
          %v958 = vpow.pop %v957
          %v959 = vsel %vm655, %v928, 0.0
          %v960 = vsel %vm656, %v930, 0.0
          %v961 = vsel %vm657, %v932, 0.0
          %v962 = vsel %vm658, %v934, 0.0
          %v963 = vsel %vm659, %v936, 0.0
          %v964 = vsel %vm660, %v938, 0.0
          %v965 = vsel %vm661, %v940, 0.0
          %v966 = vsel %vm662, %v942, 0.0
          %v967 = vsel %vm663, %v944, 0.0
          %v968 = vsel %vm664, %v946, 0.0
          %v969 = vsel %vm665, %v948, 0.0
          %v970 = vsel %vm666, %v950, 0.0
          %v971 = vsel %vm667, %v952, 0.0
          %v972 = vsel %vm668, %v954, 0.0
          %v973 = vsel %vm669, %v956, 0.0
          %v974 = vsel %vm670, %v958, 0.0
          %975 = vadd.xlane.f32.xlu0 %v959
          %v976 = vpop.xlane.xlu0 %975
          %977 = vadd.xlane.f32.xlu0 %v960
          %v978 = vpop.xlane.xlu0 %977
          %979 = vadd.xlane.f32.xlu0 %v961
          %v980 = vpop.xlane.xlu0 %979
          %981 = vadd.xlane.f32.xlu0 %v962
          %v982 = vpop.xlane.xlu0 %981
          %983 = vadd.xlane.f32.xlu0 %v963
          %v984 = vpop.xlane.xlu0 %983
          %985 = vadd.xlane.f32.xlu0 %v964
          %v986 = vpop.xlane.xlu0 %985
          %987 = vadd.xlane.f32.xlu0 %v965
          %v988 = vpop.xlane.xlu0 %987
          %989 = vadd.xlane.f32.xlu0 %v966
          %v990 = vpop.xlane.xlu0 %989
          %991 = vadd.xlane.f32.xlu0 %v967
          %v992 = vpop.xlane.xlu0 %991
          %993 = vadd.xlane.f32.xlu0 %v968
          %v994 = vpop.xlane.xlu0 %993
          %995 = vadd.xlane.f32.xlu0 %v969
          %v996 = vpop.xlane.xlu0 %995
          %997 = vadd.xlane.f32.xlu0 %v970
          %v998 = vpop.xlane.xlu0 %997
          %999 = vadd.xlane.f32.xlu0 %v971
          %v1000 = vpop.xlane.xlu0 %999
          %1001 = vadd.xlane.f32.xlu0 %v972
          %v1002 = vpop.xlane.xlu0 %1001
          %1003 = vadd.xlane.f32.xlu0 %v973
          %v1004 = vpop.xlane.xlu0 %1003
          %1005 = vadd.xlane.f32.xlu0 %v974
          %v1006 = vpop.xlane.xlu0 %1005
          %v1007 = vadd.f32 %v815, %v976
          %v1008 = vadd.f32 %v816, %v978
          %v1009 = vadd.f32 %v817, %v980
          %v1010 = vadd.f32 %v818, %v982
          %v1011 = vadd.f32 %v819, %v984
          %v1012 = vadd.f32 %v820, %v986
          %v1013 = vadd.f32 %v821, %v988
          %v1014 = vadd.f32 %v822, %v990
          %v1015 = vadd.f32 %v823, %v992
          %v1016 = vadd.f32 %v824, %v994
          %v1017 = vadd.f32 %v825, %v996
          %v1018 = vadd.f32 %v826, %v998
          %v1019 = vadd.f32 %v827, %v1000
          %v1020 = vadd.f32 %v828, %v1002
          %v1021 = vadd.f32 %v829, %v1004
          %v1022 = vadd.f32 %v830, %v1006
          %vm1023 = vcmask 7168
          %1024 = vst.msk [vmem:[#allocation3] sm:$0xff] %vm1023, %v1007
          %1025 = vst.msk [vmem:[#allocation3 + $0x8] sm:$0xff] %vm1023, %v1008
          %1026 = vst.msk [vmem:[#allocation3 + $0x10] sm:$0xff] %vm1023, %v1009
          %1027 = vst.msk [vmem:[#allocation3 + $0x18] sm:$0xff] %vm1023, %v1010
          %1028 = vst.msk [vmem:[#allocation3 + $0x20] sm:$0xff] %vm1023, %v1011
          %1029 = vst.msk [vmem:[#allocation3 + $0x28] sm:$0xff] %vm1023, %v1012
          %1030 = vst.msk [vmem:[#allocation3 + $0x30] sm:$0xff] %vm1023, %v1013
          %1031 = vst.msk [vmem:[#allocation3 + $0x38] sm:$0xff] %vm1023, %v1014
          %1032 = vst.msk [vmem:[#allocation3 + $0x40] sm:$0xff] %vm1023, %v1015
          %1033 = vst.msk [vmem:[#allocation3 + $0x48] sm:$0xff] %vm1023, %v1016
          %1034 = vst.msk [vmem:[#allocation3 + $0x50] sm:$0xff] %vm1023, %v1017
          %1035 = vst.msk [vmem:[#allocation3 + $0x58] sm:$0xff] %vm1023, %v1018
          %1036 = vst.msk [vmem:[#allocation3 + $0x60] sm:$0xff] %vm1023, %v1019
          %1037 = vst.msk [vmem:[#allocation3 + $0x68] sm:$0xff] %vm1023, %v1020
          %1038 = vst.msk [vmem:[#allocation3 + $0x70] sm:$0xff] %vm1023, %v1021
          %1039 = vst.msk [vmem:[#allocation3 + $0x78] sm:$0xff] %vm1023, %v1022
          %1040 = vst.msk [vmem:[#allocation2] sm:$0xff] %vm1023, %v735
          %1041 = vst.msk [vmem:[#allocation2 + $0x8] sm:$0xff] %vm1023, %v736
          %1042 = vst.msk [vmem:[#allocation2 + $0x10] sm:$0xff] %vm1023, %v737
          %1043 = vst.msk [vmem:[#allocation2 + $0x18] sm:$0xff] %vm1023, %v738
          %1044 = vst.msk [vmem:[#allocation2 + $0x20] sm:$0xff] %vm1023, %v739
          %1045 = vst.msk [vmem:[#allocation2 + $0x28] sm:$0xff] %vm1023, %v740
          %1046 = vst.msk [vmem:[#allocation2 + $0x30] sm:$0xff] %vm1023, %v741
          %1047 = vst.msk [vmem:[#allocation2 + $0x38] sm:$0xff] %vm1023, %v742
          %1048 = vst.msk [vmem:[#allocation2 + $0x40] sm:$0xff] %vm1023, %v743
          %1049 = vst.msk [vmem:[#allocation2 + $0x48] sm:$0xff] %vm1023, %v744
          %1050 = vst.msk [vmem:[#allocation2 + $0x50] sm:$0xff] %vm1023, %v745
          %1051 = vst.msk [vmem:[#allocation2 + $0x58] sm:$0xff] %vm1023, %v746
          %1052 = vst.msk [vmem:[#allocation2 + $0x60] sm:$0xff] %vm1023, %v747
          %1053 = vst.msk [vmem:[#allocation2 + $0x68] sm:$0xff] %vm1023, %v748
          %1054 = vst.msk [vmem:[#allocation2 + $0x70] sm:$0xff] %vm1023, %v749
          %1055 = vst.msk [vmem:[#allocation2 + $0x78] sm:$0xff] %vm1023, %v750
        $region48: #{tpu_custom_call.1} parent=35 // pred_fallthru
          _
        // Predicated region
        $region49: #{tpu_custom_call.1} parent=35 // pred_check
          %p1056 = pneg %p314
        $region50: #{tpu_custom_call.1} parent=35 // pred_check_branch
          %1058 = sbr.rel (%p1056) target = $region52
        $region51: #{tpu_custom_call.1} parent=35 // pred_region
          %s1059 = smul.u32 %s23, 128
          %v1060 = vlaneseq
          %v1061 = vshrl.u32 %v1060, 7
          %v1062 = vadd.s32 %v1061, 8
          %v1063 = vadd.s32 %v1061, 16
          %v1064 = vadd.s32 %v1061, 24
          %v1065 = vadd.s32 %v1061, 32
          %v1066 = vadd.s32 %v1061, 40
          %v1067 = vadd.s32 %v1061, 48
          %v1068 = vadd.s32 %v1061, 56
          %v1069 = vadd.s32 %v1061, 64
          %v1070 = vadd.s32 %v1061, 72
          %v1071 = vadd.s32 %v1061, 80
          %v1072 = vadd.s32 %v1061, 88
          %v1073 = vadd.s32 %v1061, 96
          %v1074 = vadd.s32 %v1061, 104
          %v1075 = vadd.s32 %v1061, 112
          %v1076 = vadd.s32 %v1061, 120
          %v1077 = vstv %s1059
          %v1078 = vadd.s32 %v1077, %v1061
          %v1079 = vadd.s32 %v1077, %v1062
          %v1080 = vadd.s32 %v1077, %v1063
          %v1081 = vadd.s32 %v1077, %v1064
          %v1082 = vadd.s32 %v1077, %v1065
          %v1083 = vadd.s32 %v1077, %v1066
          %v1084 = vadd.s32 %v1077, %v1067
          %v1085 = vadd.s32 %v1077, %v1068
          %v1086 = vadd.s32 %v1077, %v1069
          %v1087 = vadd.s32 %v1077, %v1070
          %v1088 = vadd.s32 %v1077, %v1071
          %v1089 = vadd.s32 %v1077, %v1072
          %v1090 = vadd.s32 %v1077, %v1073
          %v1091 = vadd.s32 %v1077, %v1074
          %v1092 = vadd.s32 %v1077, %v1075
          %v1093 = vadd.s32 %v1077, %v1076
          %vm1094 = vcmp.lt.s32.totalorder %v1078, 200
          %vm1095 = vcmp.lt.s32.totalorder %v1079, 200
          %vm1096 = vcmp.lt.s32.totalorder %v1080, 200
          %vm1097 = vcmp.lt.s32.totalorder %v1081, 200
          %vm1098 = vcmp.lt.s32.totalorder %v1082, 200
          %vm1099 = vcmp.lt.s32.totalorder %v1083, 200
          %vm1100 = vcmp.lt.s32.totalorder %v1084, 200
          %vm1101 = vcmp.lt.s32.totalorder %v1085, 200
          %vm1102 = vcmp.lt.s32.totalorder %v1086, 200
          %vm1103 = vcmp.lt.s32.totalorder %v1087, 200
          %vm1104 = vcmp.lt.s32.totalorder %v1088, 200
          %vm1105 = vcmp.lt.s32.totalorder %v1089, 200
          %vm1106 = vcmp.lt.s32.totalorder %v1090, 200
          %vm1107 = vcmp.lt.s32.totalorder %v1091, 200
          %vm1108 = vcmp.lt.s32.totalorder %v1092, 200
          %vm1109 = vcmp.lt.s32.totalorder %v1093, 200
          %vm1110 = vcmp.ne.s32.totalorder %v1078, %v634
          %vm1111 = vcmp.ne.s32.totalorder %v1079, %v634
          %vm1112 = vcmp.ne.s32.totalorder %v1080, %v634
          %vm1113 = vcmp.ne.s32.totalorder %v1081, %v634
          %vm1114 = vcmp.ne.s32.totalorder %v1082, %v634
          %vm1115 = vcmp.ne.s32.totalorder %v1083, %v634
          %vm1116 = vcmp.ne.s32.totalorder %v1084, %v634
          %vm1117 = vcmp.ne.s32.totalorder %v1085, %v634
          %vm1118 = vcmp.ne.s32.totalorder %v1086, %v634
          %vm1119 = vcmp.ne.s32.totalorder %v1087, %v634
          %vm1120 = vcmp.ne.s32.totalorder %v1088, %v634
          %vm1121 = vcmp.ne.s32.totalorder %v1089, %v634
          %vm1122 = vcmp.ne.s32.totalorder %v1090, %v634
          %vm1123 = vcmp.ne.s32.totalorder %v1091, %v634
          %vm1124 = vcmp.ne.s32.totalorder %v1092, %v634
          %vm1125 = vcmp.ne.s32.totalorder %v1093, %v634
          %vm1126 = vmand %vm614, %vm1110
          %vm1127 = vmand %vm615, %vm1111
          %vm1128 = vmand %vm616, %vm1112
          %vm1129 = vmand %vm617, %vm1113
          %vm1130 = vmand %vm618, %vm1114
          %vm1131 = vmand %vm619, %vm1115
          %vm1132 = vmand %vm620, %vm1116
          %vm1133 = vmand %vm621, %vm1117
          %vm1134 = vmand %vm622, %vm1118
          %vm1135 = vmand %vm623, %vm1119
          %vm1136 = vmand %vm624, %vm1120
          %vm1137 = vmand %vm625, %vm1121
          %vm1138 = vmand %vm626, %vm1122
          %vm1139 = vmand %vm627, %vm1123
          %vm1140 = vmand %vm628, %vm1124
          %vm1141 = vmand %vm629, %vm1125
          %vm1142 = vmand %vm1126, %vm635
          %vm1143 = vmand %vm1127, %vm635
          %vm1144 = vmand %vm1128, %vm635
          %vm1145 = vmand %vm1129, %vm635
          %vm1146 = vmand %vm1130, %vm635
          %vm1147 = vmand %vm1131, %vm635
          %vm1148 = vmand %vm1132, %vm635
          %vm1149 = vmand %vm1133, %vm635
          %vm1150 = vmand %vm1134, %vm635
          %vm1151 = vmand %vm1135, %vm635
          %vm1152 = vmand %vm1136, %vm635
          %vm1153 = vmand %vm1137, %vm635
          %vm1154 = vmand %vm1138, %vm635
          %vm1155 = vmand %vm1139, %vm635
          %vm1156 = vmand %vm1140, %vm635
          %vm1157 = vmand %vm1141, %vm635
          %vm1158 = vmand %vm1142, %vm1094
          %vm1159 = vmand %vm1143, %vm1095
          %vm1160 = vmand %vm1144, %vm1096
          %vm1161 = vmand %vm1145, %vm1097
          %vm1162 = vmand %vm1146, %vm1098
          %vm1163 = vmand %vm1147, %vm1099
          %vm1164 = vmand %vm1148, %vm1100
          %vm1165 = vmand %vm1149, %vm1101
          %vm1166 = vmand %vm1150, %vm1102
          %vm1167 = vmand %vm1151, %vm1103
          %vm1168 = vmand %vm1152, %vm1104
          %vm1169 = vmand %vm1153, %vm1105
          %vm1170 = vmand %vm1154, %vm1106
          %vm1171 = vmand %vm1155, %vm1107
          %vm1172 = vmand %vm1156, %vm1108
          %vm1173 = vmand %vm1157, %vm1109
          %v1174 = vld [vmem:[#allocation2] sm:$0xff]
          %v1175 = vld [vmem:[#allocation2 + $0x8] sm:$0xff]
          %v1176 = vld [vmem:[#allocation2 + $0x10] sm:$0xff]
          %v1177 = vld [vmem:[#allocation2 + $0x18] sm:$0xff]
          %v1178 = vld [vmem:[#allocation2 + $0x20] sm:$0xff]
          %v1179 = vld [vmem:[#allocation2 + $0x28] sm:$0xff]
          %v1180 = vld [vmem:[#allocation2 + $0x30] sm:$0xff]
          %v1181 = vld [vmem:[#allocation2 + $0x38] sm:$0xff]
          %v1182 = vld [vmem:[#allocation2 + $0x40] sm:$0xff]
          %v1183 = vld [vmem:[#allocation2 + $0x48] sm:$0xff]
          %v1184 = vld [vmem:[#allocation2 + $0x50] sm:$0xff]
          %v1185 = vld [vmem:[#allocation2 + $0x58] sm:$0xff]
          %v1186 = vld [vmem:[#allocation2 + $0x60] sm:$0xff]
          %v1187 = vld [vmem:[#allocation2 + $0x68] sm:$0xff]
          %v1188 = vld [vmem:[#allocation2 + $0x70] sm:$0xff]
          %v1189 = vld [vmem:[#allocation2 + $0x78] sm:$0xff]
          %v1190 = vld [vmem:[#allocation3] sm:$0xff]
          %v1191 = vld [vmem:[#allocation3 + $0x8] sm:$0xff]
          %v1192 = vld [vmem:[#allocation3 + $0x10] sm:$0xff]
          %v1193 = vld [vmem:[#allocation3 + $0x18] sm:$0xff]
          %v1194 = vld [vmem:[#allocation3 + $0x20] sm:$0xff]
          %v1195 = vld [vmem:[#allocation3 + $0x28] sm:$0xff]
          %v1196 = vld [vmem:[#allocation3 + $0x30] sm:$0xff]
          %v1197 = vld [vmem:[#allocation3 + $0x38] sm:$0xff]
          %v1198 = vld [vmem:[#allocation3 + $0x40] sm:$0xff]
          %v1199 = vld [vmem:[#allocation3 + $0x48] sm:$0xff]
          %v1200 = vld [vmem:[#allocation3 + $0x50] sm:$0xff]
          %v1201 = vld [vmem:[#allocation3 + $0x58] sm:$0xff]
          %v1202 = vld [vmem:[#allocation3 + $0x60] sm:$0xff]
          %v1203 = vld [vmem:[#allocation3 + $0x68] sm:$0xff]
          %v1204 = vld [vmem:[#allocation3 + $0x70] sm:$0xff]
          %v1205 = vld [vmem:[#allocation3 + $0x78] sm:$0xff]
          %v1206 = vmax.f32 %v1190, 1e-37
          %v1207 = vmax.f32 %v1191, 1e-37
          %v1208 = vmax.f32 %v1192, 1e-37
          %v1209 = vmax.f32 %v1193, 1e-37
          %v1210 = vmax.f32 %v1194, 1e-37
          %v1211 = vmax.f32 %v1195, 1e-37
          %v1212 = vmax.f32 %v1196, 1e-37
          %v1213 = vmax.f32 %v1197, 1e-37
          %v1214 = vmax.f32 %v1198, 1e-37
          %v1215 = vmax.f32 %v1199, 1e-37
          %v1216 = vmax.f32 %v1200, 1e-37
          %v1217 = vmax.f32 %v1201, 1e-37
          %v1218 = vmax.f32 %v1202, 1e-37
          %v1219 = vmax.f32 %v1203, 1e-37
          %v1220 = vmax.f32 %v1204, 1e-37
          %v1221 = vmax.f32 %v1205, 1e-37
          %v1222 = vlog2.pop %v1206
          %v1223 = vmul.f32 %v1222, 0.6931472
          %v1224 = vlog2.pop %v1207
          %v1225 = vmul.f32 %v1224, 0.6931472
          %v1226 = vlog2.pop %v1208
          %v1227 = vmul.f32 %v1226, 0.6931472
          %v1228 = vlog2.pop %v1209
          %v1229 = vmul.f32 %v1228, 0.6931472
          %v1230 = vlog2.pop %v1210
          %v1231 = vmul.f32 %v1230, 0.6931472
          %v1232 = vlog2.pop %v1211
          %v1233 = vmul.f32 %v1232, 0.6931472
          %v1234 = vlog2.pop %v1212
          %v1235 = vmul.f32 %v1234, 0.6931472
          %v1236 = vlog2.pop %v1213
          %v1237 = vmul.f32 %v1236, 0.6931472
          %v1238 = vlog2.pop %v1214
          %v1239 = vmul.f32 %v1238, 0.6931472
          %v1240 = vlog2.pop %v1215
          %v1241 = vmul.f32 %v1240, 0.6931472
          %v1242 = vlog2.pop %v1216
          %v1243 = vmul.f32 %v1242, 0.6931472
          %v1244 = vlog2.pop %v1217
          %v1245 = vmul.f32 %v1244, 0.6931472
          %v1246 = vlog2.pop %v1218
          %v1247 = vmul.f32 %v1246, 0.6931472
          %v1248 = vlog2.pop %v1219
          %v1249 = vmul.f32 %v1248, 0.6931472
          %v1250 = vlog2.pop %v1220
          %v1251 = vmul.f32 %v1250, 0.6931472
          %v1252 = vlog2.pop %v1221
          %v1253 = vmul.f32 %v1252, 0.6931472
          %v1254 = vadd.f32 %v1174, %v1223
          %v1255 = vadd.f32 %v1175, %v1225
          %v1256 = vadd.f32 %v1176, %v1227
          %v1257 = vadd.f32 %v1177, %v1229
          %v1258 = vadd.f32 %v1178, %v1231
          %v1259 = vadd.f32 %v1179, %v1233
          %v1260 = vadd.f32 %v1180, %v1235
          %v1261 = vadd.f32 %v1181, %v1237
          %v1262 = vadd.f32 %v1182, %v1239
          %v1263 = vadd.f32 %v1183, %v1241
          %v1264 = vadd.f32 %v1184, %v1243
          %v1265 = vadd.f32 %v1185, %v1245
          %v1266 = vadd.f32 %v1186, %v1247
          %v1267 = vadd.f32 %v1187, %v1249
          %v1268 = vadd.f32 %v1188, %v1251
          %v1269 = vadd.f32 %v1189, %v1253
          %1271 = vset.pattern.permute.xlu0 0
          %1272 = vperm.xlu0 %1271, %v1254
          %v1273 = vpop.permute.xlu0 %1272
          %1276 = vset.pattern.permute.xlu0 0
          %1277 = vperm.xlu0 %1276, %v1255
          %v1278 = vpop.permute.xlu0 %1277
          %1281 = vset.pattern.permute.xlu0 0
          %1282 = vperm.xlu0 %1281, %v1256
          %v1283 = vpop.permute.xlu0 %1282
          %1286 = vset.pattern.permute.xlu0 0
          %1287 = vperm.xlu0 %1286, %v1257
          %v1288 = vpop.permute.xlu0 %1287
          %1291 = vset.pattern.permute.xlu0 0
          %1292 = vperm.xlu0 %1291, %v1258
          %v1293 = vpop.permute.xlu0 %1292
          %1296 = vset.pattern.permute.xlu0 0
          %1297 = vperm.xlu0 %1296, %v1259
          %v1298 = vpop.permute.xlu0 %1297
          %1301 = vset.pattern.permute.xlu0 0
          %1302 = vperm.xlu0 %1301, %v1260
          %v1303 = vpop.permute.xlu0 %1302
          %1306 = vset.pattern.permute.xlu0 0
          %1307 = vperm.xlu0 %1306, %v1261
          %v1308 = vpop.permute.xlu0 %1307
          %1311 = vset.pattern.permute.xlu0 0
          %1312 = vperm.xlu0 %1311, %v1262
          %v1313 = vpop.permute.xlu0 %1312
          %1316 = vset.pattern.permute.xlu0 0
          %1317 = vperm.xlu0 %1316, %v1263
          %v1318 = vpop.permute.xlu0 %1317
          %1321 = vset.pattern.permute.xlu0 0
          %1322 = vperm.xlu0 %1321, %v1264
          %v1323 = vpop.permute.xlu0 %1322
          %1326 = vset.pattern.permute.xlu0 0
          %1327 = vperm.xlu0 %1326, %v1265
          %v1328 = vpop.permute.xlu0 %1327
          %1331 = vset.pattern.permute.xlu0 0
          %1332 = vperm.xlu0 %1331, %v1266
          %v1333 = vpop.permute.xlu0 %1332
          %1336 = vset.pattern.permute.xlu0 0
          %1337 = vperm.xlu0 %1336, %v1267
          %v1338 = vpop.permute.xlu0 %1337
          %1341 = vset.pattern.permute.xlu0 0
          %1342 = vperm.xlu0 %1341, %v1268
          %v1343 = vpop.permute.xlu0 %1342
          %1346 = vset.pattern.permute.xlu0 0
          %1347 = vperm.xlu0 %1346, %v1269
          %v1348 = vpop.permute.xlu0 %1347
          %v1350 = vsub.f32 %v1273, %v483
          %v1351 = vsub.f32 %v1278, %v486
          %v1352 = vsub.f32 %v1283, %v491
          %v1353 = vsub.f32 %v1288, %v494
          %v1354 = vsub.f32 %v1293, %v499
          %v1355 = vsub.f32 %v1298, %v502
          %v1356 = vsub.f32 %v1303, %v507
          %v1357 = vsub.f32 %v1308, %v510
          %v1358 = vsub.f32 %v1313, %v515
          %v1359 = vsub.f32 %v1318, %v518
          %v1360 = vsub.f32 %v1323, %v523
          %v1361 = vsub.f32 %v1328, %v526
          %v1362 = vsub.f32 %v1333, %v531
          %v1363 = vsub.f32 %v1338, %v534
          %v1364 = vsub.f32 %v1343, %v539
          %v1365 = vsub.f32 %v1348, %v542
          %v1366 = vmax.f32 %v1350, 0.0
          %v1367 = vmax.f32 %v1351, 0.0
          %v1368 = vmax.f32 %v1352, 0.0
          %v1369 = vmax.f32 %v1353, 0.0
          %v1370 = vmax.f32 %v1354, 0.0
          %v1371 = vmax.f32 %v1355, 0.0
          %v1372 = vmax.f32 %v1356, 0.0
          %v1373 = vmax.f32 %v1357, 0.0
          %v1374 = vmax.f32 %v1358, 0.0
          %v1375 = vmax.f32 %v1359, 0.0
          %v1376 = vmax.f32 %v1360, 0.0
          %v1377 = vmax.f32 %v1361, 0.0
          %v1378 = vmax.f32 %v1362, 0.0
          %v1379 = vmax.f32 %v1363, 0.0
          %v1380 = vmax.f32 %v1364, 0.0
          %v1381 = vmax.f32 %v1365, 0.0
          %v1382 = vand.u32 2147483647, %v1350
          %v1383 = vand.u32 2147483647, %v1351
          %v1384 = vand.u32 2147483647, %v1352
          %v1385 = vand.u32 2147483647, %v1353
          %v1386 = vand.u32 2147483647, %v1354
          %v1387 = vand.u32 2147483647, %v1355
          %v1388 = vand.u32 2147483647, %v1356
          %v1389 = vand.u32 2147483647, %v1357
          %v1390 = vand.u32 2147483647, %v1358
          %v1391 = vand.u32 2147483647, %v1359
          %v1392 = vand.u32 2147483647, %v1360
          %v1393 = vand.u32 2147483647, %v1361
          %v1394 = vand.u32 2147483647, %v1362
          %v1395 = vand.u32 2147483647, %v1363
          %v1396 = vand.u32 2147483647, %v1364
          %v1397 = vand.u32 2147483647, %v1365
          %v1398 = vsub.f32 0.0, %v1382
          %v1399 = vsub.f32 0.0, %v1383
          %v1400 = vsub.f32 0.0, %v1384
          %v1401 = vsub.f32 0.0, %v1385
          %v1402 = vsub.f32 0.0, %v1386
          %v1403 = vsub.f32 0.0, %v1387
          %v1404 = vsub.f32 0.0, %v1388
          %v1405 = vsub.f32 0.0, %v1389
          %v1406 = vsub.f32 0.0, %v1390
          %v1407 = vsub.f32 0.0, %v1391
          %v1408 = vsub.f32 0.0, %v1392
          %v1409 = vsub.f32 0.0, %v1393
          %v1410 = vsub.f32 0.0, %v1394
          %v1411 = vsub.f32 0.0, %v1395
          %v1412 = vsub.f32 0.0, %v1396
          %v1413 = vsub.f32 0.0, %v1397
          %v1414 = vmul.f32 %v1398, 1.442695
          %v1415 = vpow.pop %v1414
          %v1416 = vmul.f32 %v1399, 1.442695
          %v1417 = vpow.pop %v1416
          %v1418 = vmul.f32 %v1400, 1.442695
          %v1419 = vpow.pop %v1418
          %v1420 = vmul.f32 %v1401, 1.442695
          %v1421 = vpow.pop %v1420
          %v1422 = vmul.f32 %v1402, 1.442695
          %v1423 = vpow.pop %v1422
          %v1424 = vmul.f32 %v1403, 1.442695
          %v1425 = vpow.pop %v1424
          %v1426 = vmul.f32 %v1404, 1.442695
          %v1427 = vpow.pop %v1426
          %v1428 = vmul.f32 %v1405, 1.442695
          %v1429 = vpow.pop %v1428
          %v1430 = vmul.f32 %v1406, 1.442695
          %v1431 = vpow.pop %v1430
          %v1432 = vmul.f32 %v1407, 1.442695
          %v1433 = vpow.pop %v1432
          %v1434 = vmul.f32 %v1408, 1.442695
          %v1435 = vpow.pop %v1434
          %v1436 = vmul.f32 %v1409, 1.442695
          %v1437 = vpow.pop %v1436
          %v1438 = vmul.f32 %v1410, 1.442695
          %v1439 = vpow.pop %v1438
          %v1440 = vmul.f32 %v1411, 1.442695
          %v1441 = vpow.pop %v1440
          %v1442 = vmul.f32 %v1412, 1.442695
          %v1443 = vpow.pop %v1442
          %v1444 = vmul.f32 %v1413, 1.442695
          %v1445 = vpow.pop %v1444
          %v1446 = vadd.f32 %v1415, 1.0
          %v1447 = vadd.f32 %v1417, 1.0
          %v1448 = vadd.f32 %v1419, 1.0
          %v1449 = vadd.f32 %v1421, 1.0
          %v1450 = vadd.f32 %v1423, 1.0
          %v1451 = vadd.f32 %v1425, 1.0
          %v1452 = vadd.f32 %v1427, 1.0
          %v1453 = vadd.f32 %v1429, 1.0
          %v1454 = vadd.f32 %v1431, 1.0
          %v1455 = vadd.f32 %v1433, 1.0
          %v1456 = vadd.f32 %v1435, 1.0
          %v1457 = vadd.f32 %v1437, 1.0
          %v1458 = vadd.f32 %v1439, 1.0
          %v1459 = vadd.f32 %v1441, 1.0
          %v1460 = vadd.f32 %v1443, 1.0
          %v1461 = vadd.f32 %v1445, 1.0
          %v1462 = vlog2.pop %v1446
          %v1463 = vmul.f32 %v1462, 0.6931472
          %v1464 = vlog2.pop %v1447
          %v1465 = vmul.f32 %v1464, 0.6931472
          %v1466 = vlog2.pop %v1448
          %v1467 = vmul.f32 %v1466, 0.6931472
          %v1468 = vlog2.pop %v1449
          %v1469 = vmul.f32 %v1468, 0.6931472
          %v1470 = vlog2.pop %v1450
          %v1471 = vmul.f32 %v1470, 0.6931472
          %v1472 = vlog2.pop %v1451
          %v1473 = vmul.f32 %v1472, 0.6931472
          %v1474 = vlog2.pop %v1452
          %v1475 = vmul.f32 %v1474, 0.6931472
          %v1476 = vlog2.pop %v1453
          %v1477 = vmul.f32 %v1476, 0.6931472
          %v1478 = vlog2.pop %v1454
          %v1479 = vmul.f32 %v1478, 0.6931472
          %v1480 = vlog2.pop %v1455
          %v1481 = vmul.f32 %v1480, 0.6931472
          %v1482 = vlog2.pop %v1456
          %v1483 = vmul.f32 %v1482, 0.6931472
          %v1484 = vlog2.pop %v1457
          %v1485 = vmul.f32 %v1484, 0.6931472
          %v1486 = vlog2.pop %v1458
          %v1487 = vmul.f32 %v1486, 0.6931472
          %v1488 = vlog2.pop %v1459
          %v1489 = vmul.f32 %v1488, 0.6931472
          %v1490 = vlog2.pop %v1460
          %v1491 = vmul.f32 %v1490, 0.6931472
          %v1492 = vlog2.pop %v1461
          %v1493 = vmul.f32 %v1492, 0.6931472
          %v1494 = vadd.f32 %v1366, %v1463
          %v1495 = vadd.f32 %v1367, %v1465
          %v1496 = vadd.f32 %v1368, %v1467
          %v1497 = vadd.f32 %v1369, %v1469
          %v1498 = vadd.f32 %v1370, %v1471
          %v1499 = vadd.f32 %v1371, %v1473
          %v1500 = vadd.f32 %v1372, %v1475
          %v1501 = vadd.f32 %v1373, %v1477
          %v1502 = vadd.f32 %v1374, %v1479
          %v1503 = vadd.f32 %v1375, %v1481
          %v1504 = vadd.f32 %v1376, %v1483
          %v1505 = vadd.f32 %v1377, %v1485
          %v1506 = vadd.f32 %v1378, %v1487
          %v1507 = vadd.f32 %v1379, %v1489
          %v1508 = vadd.f32 %v1380, %v1491
          %v1509 = vadd.f32 %v1381, %v1493
          %v1510 = vsel %vm1158, %v1494, 0.0
          %v1511 = vsel %vm1159, %v1495, 0.0
          %v1512 = vsel %vm1160, %v1496, 0.0
          %v1513 = vsel %vm1161, %v1497, 0.0
          %v1514 = vsel %vm1162, %v1498, 0.0
          %v1515 = vsel %vm1163, %v1499, 0.0
          %v1516 = vsel %vm1164, %v1500, 0.0
          %v1517 = vsel %vm1165, %v1501, 0.0
          %v1518 = vsel %vm1166, %v1502, 0.0
          %v1519 = vsel %vm1167, %v1503, 0.0
          %v1520 = vsel %vm1168, %v1504, 0.0
          %v1521 = vsel %vm1169, %v1505, 0.0
          %v1522 = vsel %vm1170, %v1506, 0.0
          %v1523 = vsel %vm1171, %v1507, 0.0
          %v1524 = vsel %vm1172, %v1508, 0.0
          %v1525 = vsel %vm1173, %v1509, 0.0
          %v1526 = vadd.f32 %v1510, %v1511
          %v1527 = vadd.f32 %v1526, %v1512
          %v1528 = vadd.f32 %v1527, %v1513
          %v1529 = vadd.f32 %v1528, %v1514
          %v1530 = vadd.f32 %v1529, %v1515
          %v1531 = vadd.f32 %v1530, %v1516
          %v1532 = vadd.f32 %v1531, %v1517
          %v1533 = vadd.f32 %v1532, %v1518
          %v1534 = vadd.f32 %v1533, %v1519
          %v1535 = vadd.f32 %v1534, %v1520
          %v1536 = vadd.f32 %v1535, %v1521
          %v1537 = vadd.f32 %v1536, %v1522
          %v1538 = vadd.f32 %v1537, %v1523
          %v1539 = vadd.f32 %v1538, %v1524
          %v1540 = vadd.f32 %v1539, %v1525
          %v1541 = vrot.slane %v1540, 4
          %v1542 = vadd.f32 %v1540, %v1541
          %v1543 = vrot.slane %v1542, 2
          %v1544 = vadd.f32 %v1542, %v1543
          %v1545 = vrot.slane %v1544, 1
          %v1546 = vadd.f32 %v1544, %v1545
          %v1547 = vld [vmem:[%s252] sm:$0x1]
          %v1548 = vadd.f32 %v1547, %v1546
          %1549 = vst [vmem:[%s252] sm:$0x1] %v1548
        $region52: #{tpu_custom_call.1} parent=35 // pred_fallthru
          _
        %s1550 = sand.u32 %s149, 1
        %s1551 = scalar_lea.sflag [#allocation5], %s1550
        %s1552 = sand.u32 %s149, 1
        %s1553 = scalar_lea.vmem [#allocation4], %s1552
        // Predicated region
        $region53: #{tpu_custom_call.1} parent=35 // pred_check
          %p1554 = pneg %p159
        $region54: #{tpu_custom_call.1} parent=35 // pred_check_branch
          %1556 = sbr.rel (%p1554) target = $region56
        $region55: #{tpu_custom_call.1} parent=35 // pred_region
          %s1558 = ssub.s32 16, 16
          %1559 = vsyncadd %s1551, %s1558
          %s1560 = smul.addr %s23, 16
          %s1561 = scalar_lea.hbm %s4, %s1560
          %s1563 = sshll.u32 %s1553, 4
          %s1564 = int_to_ptr.vmem [resolvable:$true] %s1563
          %1566 = dma.vmem_to_hbm [thread:$0]  %s1564, 16, %s1561, %s1551
        $region56: #{tpu_custom_call.1} parent=35 // pred_fallthru
          _
      $region36: #{tpu_custom_call.1} parent=5 // pred_fallthru
        _
      %p1567 = scmp.le.s32.totalorder 2, %s13
      // Predicated region
      $region57: #{tpu_custom_call.1} parent=5 // pred_check
        %p1568 = pneg %p1567
      $region58: #{tpu_custom_call.1} parent=5 // pred_check_branch
        %1570 = sbr.rel (%p1568) target = $region60
      $region59: #{tpu_custom_call.1} parent=5 // pred_region
        %s1571 = ssub.s32 %s13, 2
        // Predicated region
        $region61: #{tpu_custom_call.1} parent=59 // pred_check
          %p1572 = pneg %p165
        $region62: #{tpu_custom_call.1} parent=59 // pred_check_branch
          %1574 = sbr.rel (%p1572) target = $region64
        $region63: #{tpu_custom_call.1} parent=59 // pred_region
          %s1575 = sand.u32 %s150, 1
          %s1576 = scalar_lea.sflag [#allocation5], %s1575
          %s1577 = sand.u32 %s150, 1
          %s1578 = scalar_lea.vmem [#allocation4], %s1577
          %1579 = dma.done %s1576, 16
        $region64: #{tpu_custom_call.1} parent=59 // pred_fallthru
          _
      $region60: #{tpu_custom_call.1} parent=5 // pred_fallthru
        _
    $region6: #{tpu_custom_call.1} parent=1 // loop_footer
      %s17 = sadd.s32 1, %s13
    $region7: #{tpu_custom_call.1} parent=1 // loop_footer_branch
      %12 = sbr.rel target = $region3
    $region8: #{tpu_custom_call.1} parent=1 // loop_exit
      _
    %1580 = vsyncpa [#allocation5], 1
    %s1581 = scalar_lea.sflag [#allocation5], 1
    %1582 = vsyncpa %s1581, 1

</llo_original>
